<compile_context>
chip_gen: v6e
topology: v6e:2x2x1
jax: 0.10.0
libtpu: 0.0.40
codegen_flags: <defaults>
</compile_context>

<pallas_src>
import functools

import jax
import jax.numpy as jnp
from jax.experimental import pallas as pl
from jax.experimental.pallas import tpu as pltpu

# Hyperparameters from the PyTorch module (nn.Conv2d default dilation=1; the
# module's DIL=2 is only a default of the helper functions and is NOT used).
KS = 4
PAD = 6
STR = 4
OUT_CHANNELS1 = 32
OUT_CHANNELS2 = 64
OUT_FC_FEATURES = 256
NEG_SLOPE = 0.2

# Explicit scoped-VMEM budget: small enough to be safe on v7x (64 MiB physical)
# while leaving double-buffering headroom; our tiles need well under 8 MiB.
VMEM_LIMIT_BYTES = 32 * 1024 * 1024


def _round_up(n, m):
    return ((n + m - 1) // m) * m


def _pad2d(a, rows, cols):
    if a.shape == (rows, cols):
        return a
    return jnp.pad(a, ((0, rows - a.shape[0]), (0, cols - a.shape[1])))


def _pad1d(a, n):
    if a.shape[0] == n:
        return a
    return jnp.pad(a, (0, n - a.shape[0]))


# ----------------------------------------------------------------------------
# Pallas kernel 1: tiled  out = act(x @ w + b)  with fp32 VMEM accumulator.
# Used for the two conv-as-matmul layers.
# ----------------------------------------------------------------------------
def _matmul_bias_act_kernel(x_ref, w_ref, b_ref, o_ref, acc_ref, *,
                            negative_slope, apply_act):
    @pl.when(pl.program_id(2) == 0)
    def _():
        acc_ref[...] = jnp.zeros_like(acc_ref)

    acc_ref[...] += jnp.dot(x_ref[...], w_ref[...],
                            preferred_element_type=jnp.float32)

    @pl.when(pl.program_id(2) == pl.num_programs(2) - 1)
    def _():
        acc = acc_ref[...] + b_ref[...]          # epilogue in f32
        if apply_act:
            acc = jnp.where(acc >= 0, acc, negative_slope * acc)
        o_ref[...] = acc.astype(o_ref.dtype)


def dense_tiled(x, w, b, *, act, out_dtype=jnp.float32,
                negative_slope=NEG_SLOPE, tm=256, tn=256, tk=512):
    """y = leakyrelu(x @ w + b) if act else (x @ w + b).

    x:(M,K), w:(K,N), b:(N,). Operands are zero-padded to MXU/lane-friendly
    sizes (M->16, K/N->128 multiples), run in bf16 on the MXU with fp32
    accumulation, and the padding is sliced off the result.
    """
    M, K = x.shape
    K2, N = w.shape
    assert K == K2
    Mp = _round_up(M, 16)            # bf16 sublane packing
    Kp = _round_up(K, 128)
    Np = _round_up(N, 128)           # lane-dense output stores
    tm = min(tm, Mp)
    tn = min(tn, Np)
    tk = min(tk, Kp)
    Mp = _round_up(Mp, tm)
    Np = _round_up(Np, tn)
    Kp = _round_up(Kp, tk)

    xp = _pad2d(x, Mp, Kp).astype(jnp.bfloat16)
    wp = _pad2d(w, Kp, Np).astype(jnp.bfloat16)
    bp = _pad1d(b, Np).astype(jnp.float32).reshape(1, Np)

    out_itemsize = jnp.dtype(out_dtype).itemsize
    cost = pl.CostEstimate(
        flops=2 * Mp * Np * Kp,
        transcendentals=0,
        bytes_accessed=xp.size * 2 + wp.size * 2 + bp.size * 4
                       + Mp * Np * out_itemsize,
    )
    kern = functools.partial(_matmul_bias_act_kernel,
                             negative_slope=negative_slope, apply_act=act)
    out = pl.pallas_call(
        kern,
        out_shape=jax.ShapeDtypeStruct((Mp, Np), out_dtype),
        grid=(Mp // tm, Np // tn, Kp // tk),
        in_specs=[
            pl.BlockSpec((tm, tk), lambda i, j, k: (i, k)),
            pl.BlockSpec((tk, tn), lambda i, j, k: (k, j)),
            pl.BlockSpec((1, tn), lambda i, j, k: (0, j)),
        ],
        out_specs=pl.BlockSpec((tm, tn), lambda i, j, k: (i, j)),
        scratch_shapes=[pltpu.VMEM((tm, tn), jnp.float32)],
        compiler_params=pltpu.CompilerParams(
            dimension_semantics=("parallel", "parallel", "arbitrary"),
            vmem_limit_bytes=VMEM_LIMIT_BYTES,
        ),
        cost_estimate=cost,
    )(xp, wp, bp)
    if Mp != M or Np != N:
        out = out[:M, :N]
    return out


# ----------------------------------------------------------------------------
# Pallas kernel 2: fused FC head
#   out = leakyrelu(x @ W1 + b1) @ W2 + b2
# W1 = [fc11_w | fc21_w] (N=512), W2 = blockdiag(fc12_w, fc22_w) (N=2*latent),
# so muz and logvarz come out of ONE kernel; the 512-wide intermediate stays
# in registers/VMEM.
# ----------------------------------------------------------------------------
def _fused_head_kernel(x_ref, w1_ref, b1_ref, w2_ref, b2_ref, o_ref, *,
                       negative_slope):
    h = jnp.dot(x_ref[...], w1_ref[...], preferred_element_type=jnp.float32)
    h = h + b1_ref[...]
    h = jnp.where(h >= 0, h, negative_slope * h)
    o = jnp.dot(h.astype(w2_ref.dtype), w2_ref[...],
                preferred_element_type=jnp.float32)
    o_ref[...] = (o + b2_ref[...]).astype(o_ref.dtype)


def fused_fc_head(x, w1, b1, w2, b2, *, negative_slope=NEG_SLOPE, tm=256):
    """x:(M,K), w1:(K,H), b1:(H,), w2:(H,N), b2:(N,) -> (M,N) in f32."""
    M, K = x.shape
    K2, H = w1.shape
    H2, N = w2.shape
    assert K == K2 and H == H2
    Mp = _round_up(M, 16)
    Kp = _round_up(K, 128)
    Hp = _round_up(H, 128)
    Np = _round_up(N, 128)
    tm = min(tm, Mp)
    Mp = _round_up(Mp, tm)

    xp = _pad2d(x, Mp, Kp).astype(jnp.bfloat16)
    w1p = _pad2d(w1, Kp, Hp).astype(jnp.bfloat16)
    b1p = _pad1d(b1, Hp).astype(jnp.float32).reshape(1, Hp)
    w2p = _pad2d(w2, Hp, Np).astype(jnp.bfloat16)
    b2p = _pad1d(b2, Np).astype(jnp.float32).reshape(1, Np)

    cost = pl.CostEstimate(
        flops=2 * Mp * (Kp * Hp + Hp * Np),
        transcendentals=0,
        bytes_accessed=xp.size * 2 + w1p.size * 2 + w2p.size * 2
                       + b1p.size * 4 + b2p.size * 4 + Mp * Np * 4,
    )
    out = pl.pallas_call(
        functools.partial(_fused_head_kernel, negative_slope=negative_slope),
        out_shape=jax.ShapeDtypeStruct((Mp, Np), jnp.float32),
        grid=(Mp // tm,),
        in_specs=[
            pl.BlockSpec((tm, Kp), lambda i: (i, 0)),
            pl.BlockSpec((Kp, Hp), lambda i: (0, 0)),
            pl.BlockSpec((1, Hp), lambda i: (0, 0)),
            pl.BlockSpec((Hp, Np), lambda i: (0, 0)),
            pl.BlockSpec((1, Np), lambda i: (0, 0)),
        ],
        out_specs=pl.BlockSpec((tm, Np), lambda i: (i, 0)),
        compiler_params=pltpu.CompilerParams(
            dimension_semantics=("parallel",),
            vmem_limit_bytes=VMEM_LIMIT_BYTES,
        ),
        cost_estimate=cost,
    )(xp, w1p, b1p, w2p, b2p)
    if Mp != M or Np != N:
        out = out[:M, :N]
    return out


# ----------------------------------------------------------------------------
# Conv2d (NHWC) via im2col + tiled matmul kernel.
# ----------------------------------------------------------------------------
def _im2col_nhwc(x, ksize, stride, pad):
    # stride == ksize in this module => non-overlapping windows, so im2col is
    # just pad + crop + reshape + transpose — no k*k-way stack, no extra copy.
    # TODO(synk): fold the patch gather into the matmul kernel (Element-indexed
    # BlockSpec over (kh, kw)) to also cover stride != kernel_size.
    assert stride == ksize, "im2col fast path assumes stride == kernel_size"
    B, H, W, C = x.shape
    Ho = (H + 2 * pad - ksize) // stride + 1
    Wo = (W + 2 * pad - ksize) // stride + 1
    xp = jnp.pad(x, ((0, 0), (pad, pad), (pad, pad), (0, 0)))
    xp = xp[:, : Ho * stride, : Wo * stride, :]
    patches = xp.reshape(B, Ho, ksize, Wo, ksize, C).transpose(0, 1, 3, 2, 4, 5)
    return patches.reshape(B * Ho * Wo, ksize * ksize * C), Ho, Wo


def conv2d_leakyrelu(x_nhwc, wmat, b, *, ksize=KS, stride=STR, pad=PAD):
    """x_nhwc:(B,H,W,C); wmat:(KH*KW*IC, OC) pre-flattened at init; NHWC out."""
    B = x_nhwc.shape[0]
    OC = wmat.shape[1]
    patches, Ho, Wo = _im2col_nhwc(x_nhwc, ksize, stride, pad)
    y = dense_tiled(patches, wmat, b, act=True, out_dtype=jnp.bfloat16)
    return y.reshape(B, Ho, Wo, OC)


# ----------------------------------------------------------------------------
# Parameters
# ----------------------------------------------------------------------------
def conv_out_hw(n, k=KS, s=STR, p=PAD, d=1):
    return (n + 2 * p - d * (k - 1) - 1) // s + 1


def init_params_pytorch_layout(key, img_shape, latent_dim):
    """Random params in exactly the PyTorch layouts of EncoderConv."""
    c_in = img_shape[0]
    h1, w1 = conv_out_hw(img_shape[1]), conv_out_hw(img_shape[2])
    h2, w2 = conv_out_hw(h1), conv_out_hw(w1)
    in_features = OUT_CHANNELS2 * h2 * w2
    ks = jax.random.split(key, 12)

    def nrm(k, shape, scale=0.05):
        return (scale * jax.random.normal(k, shape)).astype(jnp.float32)

    pt = {
        "conv1_w": nrm(ks[0], (OUT_CHANNELS1, c_in, KS, KS)),
        "conv1_b": nrm(ks[1], (OUT_CHANNELS1,)),
        "conv2_w": nrm(ks[2], (OUT_CHANNELS2, OUT_CHANNELS1, KS, KS)),
        "conv2_b": nrm(ks[3], (OUT_CHANNELS2,)),
        "fc11_w": nrm(ks[4], (OUT_FC_FEATURES, in_features)),
        "fc11_b": nrm(ks[5], (OUT_FC_FEATURES,)),
        "fc12_w": nrm(ks[6], (latent_dim, OUT_FC_FEATURES)),
        "fc12_b": nrm(ks[7], (latent_dim,)),
        "fc21_w": nrm(ks[8], (OUT_FC_FEATURES, in_features)),
        "fc21_b": nrm(ks[9], (OUT_FC_FEATURES,)),
        "fc22_w": nrm(ks[10], (latent_dim, OUT_FC_FEATURES)),
        "fc22_b": nrm(ks[11], (latent_dim,)),
    }
    return pt, in_features


def pack_params(pt, img_shape, latent_dim):
    """One-time layout work: all transposes/permutations/fusions hoisted here."""
    h1, w1 = conv_out_hw(img_shape[1]), conv_out_hw(img_shape[2])
    h2, w2 = conv_out_hw(h1), conv_out_hw(w1)
    oc2 = OUT_CHANNELS2
    fc = OUT_FC_FEATURES

    def conv_w(w):   # (OC, IC, KH, KW) -> (KH*KW*IC, OC) matching im2col order
        oc = w.shape[0]
        return w.transpose(2, 3, 1, 0).reshape(-1, oc).astype(jnp.bfloat16)

    def fc1_w_nhwc(w):
        # PyTorch (out, C*H*W) consuming NCHW flatten -> (H*W*C, out) consuming
        # the NHWC flatten our conv pipeline produces.  Exactly equivalent math.
        out = w.shape[0]
        return (w.reshape(out, oc2, h2, w2).transpose(0, 2, 3, 1)
                 .reshape(out, h2 * w2 * oc2).T)

    # Fuse the two parallel heads: stage 1 concat (N=512), stage 2 block-diag.
    w1m = jnp.concatenate([fc1_w_nhwc(pt["fc11_w"]),
                           fc1_w_nhwc(pt["fc21_w"])], axis=1)     # (in, 2*FC)
    b1v = jnp.concatenate([pt["fc11_b"], pt["fc21_b"]])            # (2*FC,)
    w2m = jnp.zeros((2 * fc, 2 * latent_dim), jnp.float32)
    w2m = w2m.at[:fc, :latent_dim].set(pt["fc12_w"].T)
    w2m = w2m.at[fc:, latent_dim:].set(pt["fc22_w"].T)             # (2*FC, 2*L)
    b2v = jnp.concatenate([pt["fc12_b"], pt["fc22_b"]])

    return {
        "conv1_w": conv_w(pt["conv1_w"]),
        "conv1_b": pt["conv1_b"].astype(jnp.float32),
        "conv2_w": conv_w(pt["conv2_w"]),
        "conv2_b": pt["conv2_b"].astype(jnp.float32),
        "head_w1": w1m.astype(jnp.bfloat16),
        "head_b1": b1v.astype(jnp.float32),
        "head_w2": w2m.astype(jnp.bfloat16),
        "head_b2": b2v.astype(jnp.float32),
    }


# ----------------------------------------------------------------------------
# EncoderConv forward
# ----------------------------------------------------------------------------
def encoder_conv_forward(params, x, img_shape, latent_dim):
    c, h, w = img_shape
    x = x.reshape((-1, c, h, w))                 # x.view((-1,) + img_shape)
    x = jnp.transpose(x, (0, 2, 3, 1))           # single NCHW->NHWC at entry
    x = conv2d_leakyrelu(x, params["conv1_w"], params["conv1_b"])
    x = conv2d_leakyrelu(x, params["conv2_w"], params["conv2_b"])
    b = x.shape[0]
    feats = x.reshape(b, -1)                     # NHWC flatten (head weights
                                                 # were permuted at init to
                                                 # consume this order)
    out = fused_fc_head(feats, params["head_w1"], params["head_b1"],
                        params["head_w2"], params["head_b2"])
    muz = out[:, :latent_dim]
    logvarz = out[:, latent_dim:2 * latent_dim]
    return muz, logvarz


if __name__ == "__main__":
    img_shape = (4, 16, 16)   # (C, H, W)
    latent_dim = 8
    batch = 2

    key = jax.random.PRNGKey(0)
    kp, kx = jax.random.split(key)
    pt_params, in_features = init_params_pytorch_layout(kp, img_shape, latent_dim)
    params = pack_params(pt_params, img_shape, latent_dim)

    x = jax.random.normal(kx, (batch,) + img_shape, dtype=jnp.float32)

    fwd = jax.jit(functools.partial(encoder_conv_forward,
                                    img_shape=img_shape, latent_dim=latent_dim))
    muz, logvarz = fwd(params, x)
    jax.block_until_ready((muz, logvarz))

    assert muz.shape == (batch, latent_dim)
    assert logvarz.shape == (batch, latent_dim)
    print("KERNEL_OK")
</pallas_src>

<mosaic_0001>
module attributes {stable_mosaic.version = 11 : i64} {
  func.func @_matmul_bias_act_kernel(%arg0: i32, %arg1: i32, %arg2: i32, %arg3: memref<112x128xbf16, #tpu.memory_space<vmem>>, %arg4: memref<128x128xbf16, #tpu.memory_space<vmem>>, %arg5: memref<1x128xf32, #tpu.memory_space<vmem>>, %arg6: memref<112x128xbf16, #tpu.memory_space<vmem>>, %arg7: memref<112x128xf32, #tpu.memory_space<vmem>>) attributes {dimension_semantics = [#tpu.dimension_semantics<parallel>, #tpu.dimension_semantics<parallel>, #tpu.dimension_semantics<arbitrary>], iteration_bounds = array<i64: 1, 1, 1>, scalar_prefetch = 0 : i64, scratch_operands = 1 : i64, tpu.core_type = #tpu.core_type<tc>, window_params = [{transform_indices = @transform_0, window_bounds = array<i64: 112, 128>}, {transform_indices = @transform_1, window_bounds = array<i64: 128, 128>}, {transform_indices = @transform_2, window_bounds = array<i64: 1, 128>}, {transform_indices = @transform_3, window_bounds = array<i64: 112, 128>}]} {
    %c0_i32 = arith.constant 0 : i32
    %0 = arith.cmpi eq, %arg2, %c0_i32 : i32
    %1 = arith.extui %0 : i1 to i32
    %c0_i32_0 = arith.constant 0 : i32
    %2 = arith.cmpi ne, %1, %c0_i32_0 : i32
    scf.if %2 {
      %cst_10 = arith.constant 0.000000e+00 : f32
      %12 = vector.broadcast %cst_10 : f32 to vector<112x128xf32>
      %c0_11 = arith.constant 0 : index
      %c0_12 = arith.constant 0 : index
      %13 = vector.load %arg7[%c0_11, %c0_12] : memref<112x128xf32, #tpu.memory_space<vmem>>, vector<112x128xf32>
      tpu.vector_store %arg7[%c0_11, %c0_12], %12 {strides = array<i32>} : memref<112x128xf32, #tpu.memory_space<vmem>>, vector<112x128xf32>,
    } else {
    }
    %c0 = arith.constant 0 : index
    %c0_1 = arith.constant 0 : index
    %3 = vector.load %arg7[%c0, %c0_1] : memref<112x128xf32, #tpu.memory_space<vmem>>, vector<112x128xf32>
    %c0_2 = arith.constant 0 : index
    %c0_3 = arith.constant 0 : index
    %4 = vector.load %arg3[%c0_2, %c0_3] : memref<112x128xbf16, #tpu.memory_space<vmem>>, vector<112x128xbf16>
    %c0_4 = arith.constant 0 : index
    %c0_5 = arith.constant 0 : index
    %5 = vector.load %arg4[%c0_4, %c0_5] : memref<128x128xbf16, #tpu.memory_space<vmem>>, vector<128x128xbf16>
    %cst = arith.constant dense<0.000000e+00> : vector<112x128xf32>
    %6 = tpu.matmul %4, %5, %cst {dimension_numbers = #tpu.dot_dimension_numbers<[1], [0], [0], [1], [0, 0, 1, 1], [], []>} : vector<112x128xbf16>, vector<128x128xbf16>, vector<112x128xf32> -> vector<112x128xf32>
    %7 = arith.addf %3, %6 : vector<112x128xf32>
    %c0_6 = arith.constant 0 : index
    %c0_7 = arith.constant 0 : index
    %8 = vector.load %arg7[%c0_6, %c0_7] : memref<112x128xf32, #tpu.memory_space<vmem>>, vector<112x128xf32>
    tpu.vector_store %arg7[%c0_6, %c0_7], %7 {strides = array<i32>} : memref<112x128xf32, #tpu.memory_space<vmem>>, vector<112x128xf32>,
    %c0_i32_8 = arith.constant 0 : i32
    %9 = arith.cmpi eq, %arg2, %c0_i32_8 : i32
    %10 = arith.extui %9 : i1 to i32
    %c0_i32_9 = arith.constant 0 : i32
    %11 = arith.cmpi ne, %10, %c0_i32_9 : i32
    scf.if %11 {
      %c0_10 = arith.constant 0 : index
      %c0_11 = arith.constant 0 : index
      %12 = vector.load %arg7[%c0_10, %c0_11] : memref<112x128xf32, #tpu.memory_space<vmem>>, vector<112x128xf32>
      %c0_12 = arith.constant 0 : index
      %c0_13 = arith.constant 0 : index
      %13 = vector.load %arg5[%c0_12, %c0_13] : memref<1x128xf32, #tpu.memory_space<vmem>>, vector<1x128xf32>
      %14 = vector.broadcast %13 : vector<1x128xf32> to vector<112x128xf32>
      %15 = arith.addf %12, %14 : vector<112x128xf32>
      %cst_14 = arith.constant 0.000000e+00 : f32
      %16 = vector.broadcast %cst_14 : f32 to vector<112x128xf32>
      %17 = arith.cmpf oge, %15, %16 : vector<112x128xf32>
      %cst_15 = arith.constant 2.000000e-01 : f32
      %18 = vector.broadcast %cst_15 : f32 to vector<112x128xf32>
      %19 = arith.mulf %18, %15 : vector<112x128xf32>
      %20 = arith.select %17, %15, %19 : vector<112x128xi1>, vector<112x128xf32>
      %21 = arith.truncf %20 : vector<112x128xf32> to vector<112x128xbf16>
      %c0_16 = arith.constant 0 : index
      %c0_17 = arith.constant 0 : index
      %22 = vector.load %arg6[%c0_16, %c0_17] : memref<112x128xbf16, #tpu.memory_space<vmem>>, vector<112x128xbf16>
      tpu.vector_store %arg6[%c0_16, %c0_17], %21 {strides = array<i32>} : memref<112x128xbf16, #tpu.memory_space<vmem>>, vector<112x128xbf16>,
    } else {
    }
    return
  }
  func.func @transform_0(%arg0: i32, %arg1: i32, %arg2: i32) -> (i32, i32) {
    %c0_i32 = arith.constant 0 : i32
    return %arg0, %arg2 : i32, i32
  }
  func.func @transform_1(%arg0: i32, %arg1: i32, %arg2: i32) -> (i32, i32) {
    %c0_i32 = arith.constant 0 : i32
    return %arg2, %arg1 : i32, i32
  }
  func.func @transform_2(%arg0: i32, %arg1: i32, %arg2: i32) -> (i32, i32) {
    %c0_i32 = arith.constant 0 : i32
    %c0_i32_0 = arith.constant 0 : i32
    return %c0_i32, %arg1 : i32, i32
  }
  func.func @transform_3(%arg0: i32, %arg1: i32, %arg2: i32) -> (i32, i32) {
    %c0_i32 = arith.constant 0 : i32
    return %arg0, %arg1 : i32, i32
  }
}

module attributes {stable_mosaic.version = 11 : i64} {
  func.func @_matmul_bias_act_kernel(%arg0: i32, %arg1: i32, %arg2: i32, %arg3: memref<32x512xbf16, #tpu.memory_space<vmem>>, %arg4: memref<512x128xbf16, #tpu.memory_space<vmem>>, %arg5: memref<1x128xf32, #tpu.memory_space<vmem>>, %arg6: memref<32x128xbf16, #tpu.memory_space<vmem>>, %arg7: memref<32x128xf32, #tpu.memory_space<vmem>>) attributes {dimension_semantics = [#tpu.dimension_semantics<parallel>, #tpu.dimension_semantics<parallel>, #tpu.dimension_semantics<arbitrary>], iteration_bounds = array<i64: 1, 1, 1>, scalar_prefetch = 0 : i64, scratch_operands = 1 : i64, tpu.core_type = #tpu.core_type<tc>, window_params = [{transform_indices = @transform_0, window_bounds = array<i64: 32, 512>}, {transform_indices = @transform_1, window_bounds = array<i64: 512, 128>}, {transform_indices = @transform_2, window_bounds = array<i64: 1, 128>}, {transform_indices = @transform_3, window_bounds = array<i64: 32, 128>}]} {
    %c0_i32 = arith.constant 0 : i32
    %0 = arith.cmpi eq, %arg2, %c0_i32 : i32
    %1 = arith.extui %0 : i1 to i32
    %c0_i32_0 = arith.constant 0 : i32
    %2 = arith.cmpi ne, %1, %c0_i32_0 : i32
    scf.if %2 {
      %cst_10 = arith.constant 0.000000e+00 : f32
      %12 = vector.broadcast %cst_10 : f32 to vector<32x128xf32>
      %c0_11 = arith.constant 0 : index
      %c0_12 = arith.constant 0 : index
      %13 = vector.load %arg7[%c0_11, %c0_12] : memref<32x128xf32, #tpu.memory_space<vmem>>, vector<32x128xf32>
      tpu.vector_store %arg7[%c0_11, %c0_12], %12 {strides = array<i32>} : memref<32x128xf32, #tpu.memory_space<vmem>>, vector<32x128xf32>,
    } else {
    }
    %c0 = arith.constant 0 : index
    %c0_1 = arith.constant 0 : index
    %3 = vector.load %arg7[%c0, %c0_1] : memref<32x128xf32, #tpu.memory_space<vmem>>, vector<32x128xf32>
    %c0_2 = arith.constant 0 : index
    %c0_3 = arith.constant 0 : index
    %4 = vector.load %arg3[%c0_2, %c0_3] : memref<32x512xbf16, #tpu.memory_space<vmem>>, vector<32x512xbf16>
    %c0_4 = arith.constant 0 : index
    %c0_5 = arith.constant 0 : index
    %5 = vector.load %arg4[%c0_4, %c0_5] : memref<512x128xbf16, #tpu.memory_space<vmem>>, vector<512x128xbf16>
    %cst = arith.constant dense<0.000000e+00> : vector<32x128xf32>
    %6 = tpu.matmul %4, %5, %cst {dimension_numbers = #tpu.dot_dimension_numbers<[1], [0], [0], [1], [0, 0, 1, 1], [], []>} : vector<32x512xbf16>, vector<512x128xbf16>, vector<32x128xf32> -> vector<32x128xf32>
    %7 = arith.addf %3, %6 : vector<32x128xf32>
    %c0_6 = arith.constant 0 : index
    %c0_7 = arith.constant 0 : index
    %8 = vector.load %arg7[%c0_6, %c0_7] : memref<32x128xf32, #tpu.memory_space<vmem>>, vector<32x128xf32>
    tpu.vector_store %arg7[%c0_6, %c0_7], %7 {strides = array<i32>} : memref<32x128xf32, #tpu.memory_space<vmem>>, vector<32x128xf32>,
    %c0_i32_8 = arith.constant 0 : i32
    %9 = arith.cmpi eq, %arg2, %c0_i32_8 : i32
    %10 = arith.extui %9 : i1 to i32
    %c0_i32_9 = arith.constant 0 : i32
    %11 = arith.cmpi ne, %10, %c0_i32_9 : i32
    scf.if %11 {
      %c0_10 = arith.constant 0 : index
      %c0_11 = arith.constant 0 : index
      %12 = vector.load %arg7[%c0_10, %c0_11] : memref<32x128xf32, #tpu.memory_space<vmem>>, vector<32x128xf32>
      %c0_12 = arith.constant 0 : index
      %c0_13 = arith.constant 0 : index
      %13 = vector.load %arg5[%c0_12, %c0_13] : memref<1x128xf32, #tpu.memory_space<vmem>>, vector<1x128xf32>
      %14 = vector.broadcast %13 : vector<1x128xf32> to vector<32x128xf32>
      %15 = arith.addf %12, %14 : vector<32x128xf32>
      %cst_14 = arith.constant 0.000000e+00 : f32
      %16 = vector.broadcast %cst_14 : f32 to vector<32x128xf32>
      %17 = arith.cmpf oge, %15, %16 : vector<32x128xf32>
      %cst_15 = arith.constant 2.000000e-01 : f32
      %18 = vector.broadcast %cst_15 : f32 to vector<32x128xf32>
      %19 = arith.mulf %18, %15 : vector<32x128xf32>
      %20 = arith.select %17, %15, %19 : vector<32x128xi1>, vector<32x128xf32>
      %21 = arith.truncf %20 : vector<32x128xf32> to vector<32x128xbf16>
      %c0_16 = arith.constant 0 : index
      %c0_17 = arith.constant 0 : index
      %22 = vector.load %arg6[%c0_16, %c0_17] : memref<32x128xbf16, #tpu.memory_space<vmem>>, vector<32x128xbf16>
      tpu.vector_store %arg6[%c0_16, %c0_17], %21 {strides = array<i32>} : memref<32x128xbf16, #tpu.memory_space<vmem>>, vector<32x128xbf16>,
    } else {
    }
    return
  }
  func.func @transform_0(%arg0: i32, %arg1: i32, %arg2: i32) -> (i32, i32) {
    %c0_i32 = arith.constant 0 : i32
    return %arg0, %arg2 : i32, i32
  }
  func.func @transform_1(%arg0: i32, %arg1: i32, %arg2: i32) -> (i32, i32) {
    %c0_i32 = arith.constant 0 : i32
    return %arg2, %arg1 : i32, i32
  }
  func.func @transform_2(%arg0: i32, %arg1: i32, %arg2: i32) -> (i32, i32) {
    %c0_i32 = arith.constant 0 : i32
    %c0_i32_0 = arith.constant 0 : i32
    return %c0_i32, %arg1 : i32, i32
  }
  func.func @transform_3(%arg0: i32, %arg1: i32, %arg2: i32) -> (i32, i32) {
    %c0_i32 = arith.constant 0 : i32
    return %arg0, %arg1 : i32, i32
  }
}

module attributes {stable_mosaic.version = 11 : i64} {
  func.func @_fused_head_kernel(%arg0: i32, %arg1: memref<16x1024xbf16, #tpu.memory_space<vmem>>, %arg2: memref<1024x512xbf16, #tpu.memory_space<vmem>>, %arg3: memref<1x512xf32, #tpu.memory_space<vmem>>, %arg4: memref<512x128xbf16, #tpu.memory_space<vmem>>, %arg5: memref<1x128xf32, #tpu.memory_space<vmem>>, %arg6: memref<16x128xf32, #tpu.memory_space<vmem>>) attributes {dimension_semantics = [#tpu.dimension_semantics<parallel>], iteration_bounds = array<i64: 1>, scalar_prefetch = 0 : i64, scratch_operands = 0 : i64, tpu.core_type = #tpu.core_type<tc>, window_params = [{transform_indices = @transform_0, window_bounds = array<i64: 16, 1024>}, {pipeline_mode = #tpu.pipeline_mode<synchronous>, transform_indices = @transform_1, window_bounds = array<i64: 1024, 512>}, {pipeline_mode = #tpu.pipeline_mode<synchronous>, transform_indices = @transform_2, window_bounds = array<i64: 1, 512>}, {pipeline_mode = #tpu.pipeline_mode<synchronous>, transform_indices = @transform_3, window_bounds = array<i64: 512, 128>}, {pipeline_mode = #tpu.pipeline_mode<synchronous>, transform_indices = @transform_4, window_bounds = array<i64: 1, 128>}, {transform_indices = @transform_5, window_bounds = array<i64: 16, 128>}]} {
    %c0 = arith.constant 0 : index
    %c0_0 = arith.constant 0 : index
    %0 = vector.load %arg1[%c0, %c0_0] : memref<16x1024xbf16, #tpu.memory_space<vmem>>, vector<16x1024xbf16>
    %c0_1 = arith.constant 0 : index
    %c0_2 = arith.constant 0 : index
    %1 = vector.load %arg2[%c0_1, %c0_2] : memref<1024x512xbf16, #tpu.memory_space<vmem>>, vector<1024x512xbf16>
    %cst = arith.constant dense<0.000000e+00> : vector<16x512xf32>
    %2 = tpu.matmul %0, %1, %cst {dimension_numbers = #tpu.dot_dimension_numbers<[1], [0], [0], [1], [0, 0, 1, 1], [], []>} : vector<16x1024xbf16>, vector<1024x512xbf16>, vector<16x512xf32> -> vector<16x512xf32>
    %c0_3 = arith.constant 0 : index
    %c0_4 = arith.constant 0 : index
    %3 = vector.load %arg3[%c0_3, %c0_4] : memref<1x512xf32, #tpu.memory_space<vmem>>, vector<1x512xf32>
    %4 = vector.broadcast %3 : vector<1x512xf32> to vector<16x512xf32>
    %5 = arith.addf %2, %4 : vector<16x512xf32>
    %cst_5 = arith.constant 0.000000e+00 : f32
    %6 = vector.broadcast %cst_5 : f32 to vector<16x512xf32>
    %7 = arith.cmpf oge, %5, %6 : vector<16x512xf32>
    %cst_6 = arith.constant 2.000000e-01 : f32
    %8 = vector.broadcast %cst_6 : f32 to vector<16x512xf32>
    %9 = arith.mulf %8, %5 : vector<16x512xf32>
    %10 = arith.select %7, %5, %9 : vector<16x512xi1>, vector<16x512xf32>
    %11 = arith.truncf %10 : vector<16x512xf32> to vector<16x512xbf16>
    %c0_7 = arith.constant 0 : index
    %c0_8 = arith.constant 0 : index
    %12 = vector.load %arg4[%c0_7, %c0_8] : memref<512x128xbf16, #tpu.memory_space<vmem>>, vector<512x128xbf16>
    %cst_9 = arith.constant dense<0.000000e+00> : vector<16x128xf32>
    %13 = tpu.matmul %11, %12, %cst_9 {dimension_numbers = #tpu.dot_dimension_numbers<[1], [0], [0], [1], [0, 0, 1, 1], [], []>} : vector<16x512xbf16>, vector<512x128xbf16>, vector<16x128xf32> -> vector<16x128xf32>
    %c0_10 = arith.constant 0 : index
    %c0_11 = arith.constant 0 : index
    %14 = vector.load %arg5[%c0_10, %c0_11] : memref<1x128xf32, #tpu.memory_space<vmem>>, vector<1x128xf32>
    %15 = vector.broadcast %14 : vector<1x128xf32> to vector<16x128xf32>
    %16 = arith.addf %13, %15 : vector<16x128xf32>
    %c0_12 = arith.constant 0 : index
    %c0_13 = arith.constant 0 : index
    %17 = vector.load %arg6[%c0_12, %c0_13] : memref<16x128xf32, #tpu.memory_space<vmem>>, vector<16x128xf32>
    tpu.vector_store %arg6[%c0_12, %c0_13], %16 {strides = array<i32>} : memref<16x128xf32, #tpu.memory_space<vmem>>, vector<16x128xf32>,
    return
  }
  func.func @transform_0(%arg0: i32) -> (i32, i32) {
    %c0_i32 = arith.constant 0 : i32
    %c0_i32_0 = arith.constant 0 : i32
    return %arg0, %c0_i32 : i32, i32
  }
  func.func @transform_1(%arg0: i32) -> (i32, i32) {
    %c0_i32 = arith.constant 0 : i32
    %c0_i32_0 = arith.constant 0 : i32
    %c0_i32_1 = arith.constant 0 : i32
    return %c0_i32, %c0_i32_0 : i32, i32
  }
  func.func @transform_2(%arg0: i32) -> (i32, i32) {
    %c0_i32 = arith.constant 0 : i32
    %c0_i32_0 = arith.constant 0 : i32
    %c0_i32_1 = arith.constant 0 : i32
    return %c0_i32, %c0_i32_0 : i32, i32
  }
  func.func @transform_3(%arg0: i32) -> (i32, i32) {
    %c0_i32 = arith.constant 0 : i32
    %c0_i32_0 = arith.constant 0 : i32
    %c0_i32_1 = arith.constant 0 : i32
    return %c0_i32, %c0_i32_0 : i32, i32
  }
  func.func @transform_4(%arg0: i32) -> (i32, i32) {
    %c0_i32 = arith.constant 0 : i32
    %c0_i32_0 = arith.constant 0 : i32
    %c0_i32_1 = arith.constant 0 : i32
    return %c0_i32, %c0_i32_0 : i32, i32
  }
  func.func @transform_5(%arg0: i32) -> (i32, i32) {
    %c0_i32 = arith.constant 0 : i32
    %c0_i32_0 = arith.constant 0 : i32
    return %arg0, %c0_i32 : i32, i32
  }
}

</mosaic_0001>

<llo_original>
// kernel: encoder_conv_forward.3
$region0: #{encoder_conv_forward.3}
  #allocation0 [shape = 'u32[]', space=smem, size = 0x4, offset = 0x4, fixed_abs, tag = 'smem constant byte address 0x4 - core index']
  #allocation1 [shape = 'u32[144,128]{1,0:T(1,128)}', space=vmem, size = 0x12000, scoped, tag = 'internal scratch']
  #allocation2 [shape = 'f32[112,128]{1,0:T(8,128)}', space=vmem, size = 0xe000, scoped, tag = 'scratch operand']
  %s0 = inlined_call_operand.vmem [shape: bf16[112,128], index: 0, kind: input, shape index: {}]
  %s1 = inlined_call_operand.vmem [shape: bf16[128,128], index: 1, kind: input, shape index: {}]
  %s2 = inlined_call_operand.vmem [shape: f32[1,128], index: 2, kind: input, shape index: {}]
  %s3 = inlined_call_operand.vmem [shape: bf16[112,128], index: 3, kind: output, shape index: {}]
  %s4 = sld [smem:[#allocation0]]
  $region30: #{encoder_conv_forward.3} parent=0
    _
  %s6 = ssub.s32 1, %s4
  %s7 = scalar_select 0, %s6, %s4
  // Predicated region
  $region2: #{encoder_conv_forward.3} parent=0 // pred_check
    _
  $region3: #{encoder_conv_forward.3} parent=0 // pred_check_branch
    %9 = sbr.rel (0) target = $region5
  $region4: #{encoder_conv_forward.3} parent=0 // pred_region
    _
  $region5: #{encoder_conv_forward.3} parent=0 // pred_fallthru
    _
  // Predicated region
  $region6: #{encoder_conv_forward.3} parent=0 // pred_check
    _
  $region7: #{encoder_conv_forward.3} parent=0 // pred_check_branch
    %11 = sbr.rel (0) target = $region9
  $region8: #{encoder_conv_forward.3} parent=0 // pred_region
    _
  $region9: #{encoder_conv_forward.3} parent=0 // pred_fallthru
    _
  // Predicated region
  $region10: #{encoder_conv_forward.3} parent=0 // pred_check
    _
  $region11: #{encoder_conv_forward.3} parent=0 // pred_check_branch
    %13 = sbr.rel (0) target = $region13
  $region12: #{encoder_conv_forward.3} parent=0 // pred_region
    _
  $region13: #{encoder_conv_forward.3} parent=0 // pred_fallthru
    _
  %p15 = scmp.eq.s32.totalorder 0, 0
  // Predicated region
  $region14: #{encoder_conv_forward.3} parent=0 // pred_check
    %p16 = pneg %p15
  $region15: #{encoder_conv_forward.3} parent=0 // pred_check_branch
    %18 = sbr.rel (%p16) target = $region17
  $region16: #{encoder_conv_forward.3} parent=0 // pred_region
    %19 = vst [vmem:[#allocation2] sm:$0xff] 0.0
    %20 = vst [vmem:[#allocation2 + $0x8] sm:$0xff] 0.0
    %21 = vst [vmem:[#allocation2 + $0x10] sm:$0xff] 0.0
    %22 = vst [vmem:[#allocation2 + $0x18] sm:$0xff] 0.0
    %23 = vst [vmem:[#allocation2 + $0x20] sm:$0xff] 0.0
    %24 = vst [vmem:[#allocation2 + $0x28] sm:$0xff] 0.0
    %25 = vst [vmem:[#allocation2 + $0x30] sm:$0xff] 0.0
    %26 = vst [vmem:[#allocation2 + $0x38] sm:$0xff] 0.0
    %27 = vst [vmem:[#allocation2 + $0x40] sm:$0xff] 0.0
    %28 = vst [vmem:[#allocation2 + $0x48] sm:$0xff] 0.0
    %29 = vst [vmem:[#allocation2 + $0x50] sm:$0xff] 0.0
    %30 = vst [vmem:[#allocation2 + $0x58] sm:$0xff] 0.0
    %31 = vst [vmem:[#allocation2 + $0x60] sm:$0xff] 0.0
    %32 = vst [vmem:[#allocation2 + $0x68] sm:$0xff] 0.0
  $region17: #{encoder_conv_forward.3} parent=0 // pred_fallthru
    _
  %v33 = vld [vmem:[#allocation2] sm:$0xff]
  %v34 = vld [vmem:[#allocation2 + $0x8] sm:$0xff]
  %v35 = vld [vmem:[#allocation2 + $0x10] sm:$0xff]
  %v36 = vld [vmem:[#allocation2 + $0x18] sm:$0xff]
  %v37 = vld [vmem:[#allocation2 + $0x20] sm:$0xff]
  %v38 = vld [vmem:[#allocation2 + $0x28] sm:$0xff]
  %v39 = vld [vmem:[#allocation2 + $0x30] sm:$0xff]
  %v40 = vld [vmem:[#allocation2 + $0x38] sm:$0xff]
  %v41 = vld [vmem:[#allocation2 + $0x40] sm:$0xff]
  %v42 = vld [vmem:[#allocation2 + $0x48] sm:$0xff]
  %v43 = vld [vmem:[#allocation2 + $0x50] sm:$0xff]
  %v44 = vld [vmem:[#allocation2 + $0x58] sm:$0xff]
  %v45 = vld [vmem:[#allocation2 + $0x60] sm:$0xff]
  %v46 = vld [vmem:[#allocation2 + $0x68] sm:$0xff]
  %v47 = vld [vmem:[%s0] sm:$0xf]
  %v48 = vld [vmem:[%s0 + $0x4] sm:$0xf]
  %v49 = vld [vmem:[%s0 + $0x8] sm:$0xf]
  %v50 = vld [vmem:[%s0 + $0xc] sm:$0xf]
  %v51 = vld [vmem:[%s0 + $0x10] sm:$0xf]
  %v52 = vld [vmem:[%s0 + $0x14] sm:$0xf]
  %v53 = vld [vmem:[%s0 + $0x18] sm:$0xf]
  %v54 = vld [vmem:[%s0 + $0x1c] sm:$0xf]
  %v55 = vld [vmem:[%s0 + $0x20] sm:$0xf]
  %v56 = vld [vmem:[%s0 + $0x24] sm:$0xf]
  %v57 = vld [vmem:[%s0 + $0x28] sm:$0xf]
  %v58 = vld [vmem:[%s0 + $0x2c] sm:$0xf]
  %v59 = vld [vmem:[%s0 + $0x30] sm:$0xf]
  %v60 = vld [vmem:[%s0 + $0x34] sm:$0xf]
  %v61 = vld [vmem:[%s1] sm:$0xf]
  %v62 = vld [vmem:[%s1 + $0x4] sm:$0xf]
  %v63 = vld [vmem:[%s1 + $0x8] sm:$0xf]
  %v64 = vld [vmem:[%s1 + $0xc] sm:$0xf]
  %v65 = vld [vmem:[%s1 + $0x10] sm:$0xf]
  %v66 = vld [vmem:[%s1 + $0x14] sm:$0xf]
  %v67 = vld [vmem:[%s1 + $0x18] sm:$0xf]
  %v68 = vld [vmem:[%s1 + $0x1c] sm:$0xf]
  %v69 = vld [vmem:[%s1 + $0x20] sm:$0xf]
  %v70 = vld [vmem:[%s1 + $0x24] sm:$0xf]
  %v71 = vld [vmem:[%s1 + $0x28] sm:$0xf]
  %v72 = vld [vmem:[%s1 + $0x2c] sm:$0xf]
  %v73 = vld [vmem:[%s1 + $0x30] sm:$0xf]
  %v74 = vld [vmem:[%s1 + $0x34] sm:$0xf]
  %v75 = vld [vmem:[%s1 + $0x38] sm:$0xf]
  %v76 = vld [vmem:[%s1 + $0x3c] sm:$0xf]
  %v91 = vunpack.c.l.b16 %v47
  %v92 = vunpack.c.l.b16 %v48
  %v93 = vunpack.c.l.b16 %v49
  %v94 = vunpack.c.l.b16 %v50
  %v95 = vunpack.c.l.b16 %v51
  %v96 = vunpack.c.l.b16 %v52
  %v97 = vunpack.c.l.b16 %v53
  %v98 = vunpack.c.l.b16 %v54
  %v99 = vunpack.c.l.b16 %v55
  %v100 = vunpack.c.l.b16 %v56
  %v101 = vunpack.c.l.b16 %v57
  %v102 = vunpack.c.l.b16 %v58
  %v103 = vunpack.c.l.b16 %v59
  %v104 = vunpack.c.l.b16 %v60
  %v105 = vpack.c.b16 %v92, %v91
  %v106 = vpack.c.b16 %v94, %v93
  %v107 = vpack.c.b16 %v96, %v95
  %v108 = vpack.c.b16 %v98, %v97
  %v109 = vpack.c.b16 %v100, %v99
  %v110 = vpack.c.b16 %v102, %v101
  %v111 = vpack.c.b16 %v104, %v103
  %v135 = vunpack.c.l.b16 %v61
  %v136 = vunpack.c.l.b16 %v62
  %v137 = vunpack.c.l.b16 %v63
  %v138 = vunpack.c.l.b16 %v64
  %v139 = vunpack.c.l.b16 %v65
  %v140 = vunpack.c.l.b16 %v66
  %v141 = vunpack.c.l.b16 %v67
  %v142 = vunpack.c.l.b16 %v68
  %v143 = vunpack.c.l.b16 %v69
  %v144 = vunpack.c.l.b16 %v70
  %v145 = vunpack.c.l.b16 %v71
  %v146 = vunpack.c.l.b16 %v72
  %v147 = vunpack.c.l.b16 %v73
  %v148 = vunpack.c.l.b16 %v74
  %v149 = vunpack.c.l.b16 %v75
  %v150 = vunpack.c.l.b16 %v76
  %v151 = vpack.c.b16 %v136, %v135
  %v152 = vpack.c.b16 %v138, %v137
  %v153 = vpack.c.b16 %v140, %v139
  %v154 = vpack.c.b16 %v142, %v141
  %v155 = vpack.c.b16 %v144, %v143
  %v156 = vpack.c.b16 %v146, %v145
  %v157 = vpack.c.b16 %v148, %v147
  %v158 = vpack.c.b16 %v150, %v149
  %167 = vmatprep.subr.bf16.mxu0 0
  %168 = vmatpush1.bf16.msra.mxu0 %v158
  %169 = vmatprep.subr.bf16.mxu0 0
  %170 = vmatpush1.bf16.msra.mxu0 %v157
  %171 = vmatprep.subr.bf16.mxu0 0
  %172 = vmatpush1.bf16.msra.mxu0 %v156
  %173 = vmatprep.subr.bf16.mxu0 0
  %174 = vmatpush1.bf16.msra.mxu0 %v155
  %175 = vmatprep.subr.bf16.mxu0 0
  %176 = vmatpush1.bf16.msra.mxu0 %v154
  %177 = vmatprep.subr.bf16.mxu0 0
  %178 = vmatpush1.bf16.msra.mxu0 %v153
  %179 = vmatprep.subr.bf16.mxu0 0
  %180 = vmatpush1.bf16.msra.mxu0 %v152
  %181 = vmatprep.subr.bf16.mxu0 0
  %182 = vmatpush1.bf16.msra.mxu0 %v151
  %183 = vmatprep.subr.bf16.mxu0 0
  %184 = vmatpush2.bf16.msra.mxu0 0
  %185 = vmatprep.subr.bf16.mxu0 0
  %186 = vmatpush2.bf16.msra.mxu0 0
  %187 = vmatprep.subr.bf16.mxu0 0
  %188 = vmatpush2.bf16.msra.mxu0 0
  %189 = vmatprep.subr.bf16.mxu0 0
  %190 = vmatpush2.bf16.msra.mxu0 0
  %191 = vmatprep.subr.bf16.mxu0 0
  %192 = vmatpush2.bf16.msra.mxu0 0
  %193 = vmatprep.subr.bf16.mxu0 0
  %194 = vmatpush2.bf16.msra.mxu0 0
  %195 = vmatprep.subr.bf16.mxu0 0
  %196 = vmatpush2.bf16.msra.mxu0 0
  %197 = vmatprep.subr.bf16.mxu0 0
  %198 = vmatpush2.bf16.msra.mxu0 0
  %199 = vmatprep.mubr.bf16.mxu0 0
  %200 = vmatmul.mubr.bf16.gmra.mxu0 %v105
  %v201 = vpop.f32.mrf.mxu0
  %v202 = vadd.f32 0.0, %v201
  %v203 = vpop.f32.mrf.mxu0
  %v204 = vpop.f32.mrf.mxu0
  %v205 = vadd.f32 0.0, %v204
  %v206 = vpop.f32.mrf.mxu0
  %207 = vmatprep.mubr.bf16.mxu0 0
  %208 = vmatmul.mubr.bf16.gmra.mxu0 %v106
  %v209 = vpop.f32.mrf.mxu0
  %v210 = vadd.f32 0.0, %v209
  %v211 = vpop.f32.mrf.mxu0
  %v212 = vpop.f32.mrf.mxu0
  %v213 = vadd.f32 0.0, %v212
  %v214 = vpop.f32.mrf.mxu0
  %215 = vmatprep.mubr.bf16.mxu0 0
  %216 = vmatmul.mubr.bf16.gmra.mxu0 %v107
  %v217 = vpop.f32.mrf.mxu0
  %v218 = vadd.f32 0.0, %v217
  %v219 = vpop.f32.mrf.mxu0
  %v220 = vpop.f32.mrf.mxu0
  %v221 = vadd.f32 0.0, %v220
  %v222 = vpop.f32.mrf.mxu0
  %223 = vmatprep.mubr.bf16.mxu0 0
  %224 = vmatmul.mubr.bf16.gmra.mxu0 %v108
  %v225 = vpop.f32.mrf.mxu0
  %v226 = vadd.f32 0.0, %v225
  %v227 = vpop.f32.mrf.mxu0
  %v228 = vpop.f32.mrf.mxu0
  %v229 = vadd.f32 0.0, %v228
  %v230 = vpop.f32.mrf.mxu0
  %231 = vmatprep.mubr.bf16.mxu0 0
  %232 = vmatmul.mubr.bf16.gmra.mxu0 %v109
  %v233 = vpop.f32.mrf.mxu0
  %v234 = vadd.f32 0.0, %v233
  %v235 = vpop.f32.mrf.mxu0
  %v236 = vpop.f32.mrf.mxu0
  %v237 = vadd.f32 0.0, %v236
  %v238 = vpop.f32.mrf.mxu0
  %239 = vmatprep.mubr.bf16.mxu0 0
  %240 = vmatmul.mubr.bf16.gmra.mxu0 %v110
  %v241 = vpop.f32.mrf.mxu0
  %v242 = vadd.f32 0.0, %v241
  %v243 = vpop.f32.mrf.mxu0
  %v244 = vpop.f32.mrf.mxu0
  %v245 = vadd.f32 0.0, %v244
  %v246 = vpop.f32.mrf.mxu0
  %247 = vmatprep.mubr.bf16.mxu0 0
  %248 = vmatmul.mubr.bf16.gmra.mxu0 %v111
  %v249 = vpop.f32.mrf.mxu0
  %v250 = vadd.f32 0.0, %v249
  %v251 = vpop.f32.mrf.mxu0
  %v252 = vpop.f32.mrf.mxu0
  %v253 = vadd.f32 0.0, %v252
  %v254 = vpop.f32.mrf.mxu0
  %255 = vdwg.mxu0
  %v256 = vadd.f32 %v33, %v202
  %v257 = vadd.f32 %v34, %v205
  %v258 = vadd.f32 %v35, %v210
  %v259 = vadd.f32 %v36, %v213
  %v260 = vadd.f32 %v37, %v218
  %v261 = vadd.f32 %v38, %v221
  %v262 = vadd.f32 %v39, %v226
  %v263 = vadd.f32 %v40, %v229
  %v264 = vadd.f32 %v41, %v234
  %v265 = vadd.f32 %v42, %v237
  %v266 = vadd.f32 %v43, %v242
  %v267 = vadd.f32 %v44, %v245
  %v268 = vadd.f32 %v45, %v250
  %v269 = vadd.f32 %v46, %v253
  %270 = vst [vmem:[#allocation2] sm:$0xff] %v256
  %271 = vst [vmem:[#allocation2 + $0x8] sm:$0xff] %v257
  %272 = vst [vmem:[#allocation2 + $0x10] sm:$0xff] %v258
  %273 = vst [vmem:[#allocation2 + $0x18] sm:$0xff] %v259
  %274 = vst [vmem:[#allocation2 + $0x20] sm:$0xff] %v260
  %275 = vst [vmem:[#allocation2 + $0x28] sm:$0xff] %v261
  %276 = vst [vmem:[#allocation2 + $0x30] sm:$0xff] %v262
  %277 = vst [vmem:[#allocation2 + $0x38] sm:$0xff] %v263
  %278 = vst [vmem:[#allocation2 + $0x40] sm:$0xff] %v264
  %279 = vst [vmem:[#allocation2 + $0x48] sm:$0xff] %v265
  %280 = vst [vmem:[#allocation2 + $0x50] sm:$0xff] %v266
  %281 = vst [vmem:[#allocation2 + $0x58] sm:$0xff] %v267
  %282 = vst [vmem:[#allocation2 + $0x60] sm:$0xff] %v268
  %283 = vst [vmem:[#allocation2 + $0x68] sm:$0xff] %v269
  // Predicated region
  $region18: #{encoder_conv_forward.3} parent=0 // pred_check
    %p284 = pneg %p15
  $region19: #{encoder_conv_forward.3} parent=0 // pred_check_branch
    %286 = sbr.rel (%p284) target = $region21
  $region20: #{encoder_conv_forward.3} parent=0 // pred_region
    %v287 = vld [vmem:[#allocation2] sm:$0xff]
    %v288 = vld [vmem:[#allocation2 + $0x8] sm:$0xff]
    %v289 = vld [vmem:[#allocation2 + $0x10] sm:$0xff]
    %v290 = vld [vmem:[#allocation2 + $0x18] sm:$0xff]
    %v291 = vld [vmem:[#allocation2 + $0x20] sm:$0xff]
    %v292 = vld [vmem:[#allocation2 + $0x28] sm:$0xff]
    %v293 = vld [vmem:[#allocation2 + $0x30] sm:$0xff]
    %v294 = vld [vmem:[#allocation2 + $0x38] sm:$0xff]
    %v295 = vld [vmem:[#allocation2 + $0x40] sm:$0xff]
    %v296 = vld [vmem:[#allocation2 + $0x48] sm:$0xff]
    %v297 = vld [vmem:[#allocation2 + $0x50] sm:$0xff]
    %v298 = vld [vmem:[#allocation2 + $0x58] sm:$0xff]
    %v299 = vld [vmem:[#allocation2 + $0x60] sm:$0xff]
    %v300 = vld [vmem:[#allocation2 + $0x68] sm:$0xff]
    %v301 = vld [vmem:[%s2] sm:$0x1]
    %v303 = vlaneseq
    %v304 = vshrl.u32 %v303, 7
    %v305 = vsub.s32 0, %v304
    %v306 = vrot.slane %v301, %v305
    %v308 = vadd.f32 %v287, %v306
    %v309 = vadd.f32 %v288, %v306
    %v310 = vadd.f32 %v289, %v306
    %v311 = vadd.f32 %v290, %v306
    %v312 = vadd.f32 %v291, %v306
    %v313 = vadd.f32 %v292, %v306
    %v314 = vadd.f32 %v293, %v306
    %v315 = vadd.f32 %v294, %v306
    %v316 = vadd.f32 %v295, %v306
    %v317 = vadd.f32 %v296, %v306
    %v318 = vadd.f32 %v297, %v306
    %v319 = vadd.f32 %v298, %v306
    %v320 = vadd.f32 %v299, %v306
    %v321 = vadd.f32 %v300, %v306
    %vm322 = vcmp.ge.f32.partialorder %v308, 0.0
    %vm323 = vcmp.ge.f32.partialorder %v309, 0.0
    %vm324 = vcmp.ge.f32.partialorder %v310, 0.0
    %vm325 = vcmp.ge.f32.partialorder %v311, 0.0
    %vm326 = vcmp.ge.f32.partialorder %v312, 0.0
    %vm327 = vcmp.ge.f32.partialorder %v313, 0.0
    %vm328 = vcmp.ge.f32.partialorder %v314, 0.0
    %vm329 = vcmp.ge.f32.partialorder %v315, 0.0
    %vm330 = vcmp.ge.f32.partialorder %v316, 0.0
    %vm331 = vcmp.ge.f32.partialorder %v317, 0.0
    %vm332 = vcmp.ge.f32.partialorder %v318, 0.0
    %vm333 = vcmp.ge.f32.partialorder %v319, 0.0
    %vm334 = vcmp.ge.f32.partialorder %v320, 0.0
    %vm335 = vcmp.ge.f32.partialorder %v321, 0.0
    %v336 = vmul.f32 %v308, 0.2
    %v337 = vmul.f32 %v309, 0.2
    %v338 = vmul.f32 %v310, 0.2
    %v339 = vmul.f32 %v311, 0.2
    %v340 = vmul.f32 %v312, 0.2
    %v341 = vmul.f32 %v313, 0.2
    %v342 = vmul.f32 %v314, 0.2
    %v343 = vmul.f32 %v315, 0.2
    %v344 = vmul.f32 %v316, 0.2
    %v345 = vmul.f32 %v317, 0.2
    %v346 = vmul.f32 %v318, 0.2
    %v347 = vmul.f32 %v319, 0.2
    %v348 = vmul.f32 %v320, 0.2
    %v349 = vmul.f32 %v321, 0.2
    %v350 = vsel %vm322, %v308, %v336
    %v351 = vsel %vm323, %v309, %v337
    %v352 = vsel %vm324, %v310, %v338
    %v353 = vsel %vm325, %v311, %v339
    %v354 = vsel %vm326, %v312, %v340
    %v355 = vsel %vm327, %v313, %v341
    %v356 = vsel %vm328, %v314, %v342
    %v357 = vsel %vm329, %v315, %v343
    %v358 = vsel %vm330, %v316, %v344
    %v359 = vsel %vm331, %v317, %v345
    %v360 = vsel %vm332, %v318, %v346
    %v361 = vsel %vm333, %v319, %v347
    %v362 = vsel %vm334, %v320, %v348
    %v363 = vsel %vm335, %v321, %v349
    %v364 = vpack.c.bf16 %v351, %v350
    %v365 = vpack.c.bf16 %v353, %v352
    %v366 = vpack.c.bf16 %v355, %v354
    %v367 = vpack.c.bf16 %v357, %v356
    %v368 = vpack.c.bf16 %v359, %v358
    %v369 = vpack.c.bf16 %v361, %v360
    %v370 = vpack.c.bf16 %v363, %v362
    %v378 = vunpack.c.l.b16 %v364
    %v379 = vunpack.c.h.b16 %v364
    %v380 = vunpack.c.l.b16 %v365
    %v381 = vunpack.c.h.b16 %v365
    %v382 = vunpack.c.l.b16 %v366
    %v383 = vunpack.c.h.b16 %v366
    %v384 = vunpack.c.l.b16 %v367
    %v385 = vunpack.c.h.b16 %v367
    %v386 = vunpack.c.l.b16 %v368
    %v387 = vunpack.c.h.b16 %v368
    %v388 = vunpack.c.l.b16 %v369
    %v389 = vunpack.c.h.b16 %v369
    %v390 = vunpack.c.l.b16 %v370
    %v391 = vunpack.c.h.b16 %v370
    %v392 = vpack.c.b16 %v378, %v378
    %v393 = vpack.c.b16 %v379, %v379
    %v394 = vpack.c.b16 %v380, %v380
    %v395 = vpack.c.b16 %v381, %v381
    %v396 = vpack.c.b16 %v382, %v382
    %v397 = vpack.c.b16 %v383, %v383
    %v398 = vpack.c.b16 %v384, %v384
    %v399 = vpack.c.b16 %v385, %v385
    %v400 = vpack.c.b16 %v386, %v386
    %v401 = vpack.c.b16 %v387, %v387
    %v402 = vpack.c.b16 %v388, %v388
    %v403 = vpack.c.b16 %v389, %v389
    %v404 = vpack.c.b16 %v390, %v390
    %v405 = vpack.c.b16 %v391, %v391
    %420 = vst [vmem:[%s3] sm:$0xf] %v392
    %421 = vst [vmem:[%s3 + $0x4] sm:$0xf] %v393
    %422 = vst [vmem:[%s3 + $0x8] sm:$0xf] %v394
    %423 = vst [vmem:[%s3 + $0xc] sm:$0xf] %v395
    %424 = vst [vmem:[%s3 + $0x10] sm:$0xf] %v396
    %425 = vst [vmem:[%s3 + $0x14] sm:$0xf] %v397
    %426 = vst [vmem:[%s3 + $0x18] sm:$0xf] %v398
    %427 = vst [vmem:[%s3 + $0x1c] sm:$0xf] %v399
    %428 = vst [vmem:[%s3 + $0x20] sm:$0xf] %v400
    %429 = vst [vmem:[%s3 + $0x24] sm:$0xf] %v401
    %430 = vst [vmem:[%s3 + $0x28] sm:$0xf] %v402
    %431 = vst [vmem:[%s3 + $0x2c] sm:$0xf] %v403
    %432 = vst [vmem:[%s3 + $0x30] sm:$0xf] %v404
    %433 = vst [vmem:[%s3 + $0x34] sm:$0xf] %v405
  $region21: #{encoder_conv_forward.3} parent=0 // pred_fallthru
    _
  // Predicated region
  $region22: #{encoder_conv_forward.3} parent=0 // pred_check
    _
  $region23: #{encoder_conv_forward.3} parent=0 // pred_check_branch
    %435 = sbr.rel (0) target = $region25
  $region24: #{encoder_conv_forward.3} parent=0 // pred_region
    _
  $region25: #{encoder_conv_forward.3} parent=0 // pred_fallthru
    _
  // Predicated region
  $region26: #{encoder_conv_forward.3} parent=0 // pred_check
    _
  $region27: #{encoder_conv_forward.3} parent=0 // pred_check_branch
    %437 = sbr.rel (0) target = $region29
  $region28: #{encoder_conv_forward.3} parent=0 // pred_region
    _
  $region29: #{encoder_conv_forward.3} parent=0 // pred_fallthru
    _

// kernel: encoder_conv_forward.4
$region0: #{encoder_conv_forward.4}
  #allocation0 [shape = 'u32[]', space=smem, size = 0x4, offset = 0x4, fixed_abs, tag = 'smem constant byte address 0x4 - core index']
  #allocation1 [shape = 'u32[144,128]{1,0:T(1,128)}', space=vmem, size = 0x12000, scoped, tag = 'internal scratch']
  #allocation2 [shape = 'f32[32,128]{1,0:T(8,128)}', space=vmem, size = 0x4000, scoped, tag = 'scratch operand']
  %s0 = inlined_call_operand.vmem [shape: bf16[32,512], index: 0, kind: input, shape index: {}]
  %s1 = inlined_call_operand.vmem [shape: bf16[512,128], index: 1, kind: input, shape index: {}]
  %s2 = inlined_call_operand.vmem [shape: f32[1,128], index: 2, kind: input, shape index: {}]
  %s3 = inlined_call_operand.vmem [shape: bf16[32,128], index: 3, kind: output, shape index: {}]
  %s4 = sld [smem:[#allocation0]]
  $region30: #{encoder_conv_forward.4} parent=0
    _
  %s6 = ssub.s32 1, %s4
  %s7 = scalar_select 0, %s6, %s4
  // Predicated region
  $region2: #{encoder_conv_forward.4} parent=0 // pred_check
    _
  $region3: #{encoder_conv_forward.4} parent=0 // pred_check_branch
    %9 = sbr.rel (0) target = $region5
  $region4: #{encoder_conv_forward.4} parent=0 // pred_region
    _
  $region5: #{encoder_conv_forward.4} parent=0 // pred_fallthru
    _
  // Predicated region
  $region6: #{encoder_conv_forward.4} parent=0 // pred_check
    _
  $region7: #{encoder_conv_forward.4} parent=0 // pred_check_branch
    %11 = sbr.rel (0) target = $region9
  $region8: #{encoder_conv_forward.4} parent=0 // pred_region
    _
  $region9: #{encoder_conv_forward.4} parent=0 // pred_fallthru
    _
  // Predicated region
  $region10: #{encoder_conv_forward.4} parent=0 // pred_check
    _
  $region11: #{encoder_conv_forward.4} parent=0 // pred_check_branch
    %13 = sbr.rel (0) target = $region13
  $region12: #{encoder_conv_forward.4} parent=0 // pred_region
    _
  $region13: #{encoder_conv_forward.4} parent=0 // pred_fallthru
    _
  %p15 = scmp.eq.s32.totalorder 0, 0
  // Predicated region
  $region14: #{encoder_conv_forward.4} parent=0 // pred_check
    %p16 = pneg %p15
  $region15: #{encoder_conv_forward.4} parent=0 // pred_check_branch
    %18 = sbr.rel (%p16) target = $region17
  $region16: #{encoder_conv_forward.4} parent=0 // pred_region
    %19 = vst [vmem:[#allocation2] sm:$0xff] 0.0
    %20 = vst [vmem:[#allocation2 + $0x8] sm:$0xff] 0.0
    %21 = vst [vmem:[#allocation2 + $0x10] sm:$0xff] 0.0
    %22 = vst [vmem:[#allocation2 + $0x18] sm:$0xff] 0.0
  $region17: #{encoder_conv_forward.4} parent=0 // pred_fallthru
    _
  %v23 = vld [vmem:[#allocation2] sm:$0xff]
  %v24 = vld [vmem:[#allocation2 + $0x8] sm:$0xff]
  %v25 = vld [vmem:[#allocation2 + $0x10] sm:$0xff]
  %v26 = vld [vmem:[#allocation2 + $0x18] sm:$0xff]
  %v27 = vld [vmem:[%s0] sm:$0xff]
  %v28 = vld [vmem:[%s0 + $0x8] sm:$0xff]
  %v29 = vld [vmem:[%s0 + $0x10] sm:$0xff]
  %v30 = vld [vmem:[%s0 + $0x18] sm:$0xff]
  %v31 = vld [vmem:[%s0 + $0x20] sm:$0xff]
  %v32 = vld [vmem:[%s0 + $0x28] sm:$0xff]
  %v33 = vld [vmem:[%s0 + $0x30] sm:$0xff]
  %v34 = vld [vmem:[%s0 + $0x38] sm:$0xff]
  %v35 = vld [vmem:[%s1] sm:$0xf]
  %v36 = vld [vmem:[%s1 + $0x4] sm:$0xf]
  %v37 = vld [vmem:[%s1 + $0x8] sm:$0xf]
  %v38 = vld [vmem:[%s1 + $0xc] sm:$0xf]
  %v39 = vld [vmem:[%s1 + $0x10] sm:$0xf]
  %v40 = vld [vmem:[%s1 + $0x14] sm:$0xf]
  %v41 = vld [vmem:[%s1 + $0x18] sm:$0xf]
  %v42 = vld [vmem:[%s1 + $0x1c] sm:$0xf]
  %v43 = vld [vmem:[%s1 + $0x20] sm:$0xf]
  %v44 = vld [vmem:[%s1 + $0x24] sm:$0xf]
  %v45 = vld [vmem:[%s1 + $0x28] sm:$0xf]
  %v46 = vld [vmem:[%s1 + $0x2c] sm:$0xf]
  %v47 = vld [vmem:[%s1 + $0x30] sm:$0xf]
  %v48 = vld [vmem:[%s1 + $0x34] sm:$0xf]
  %v49 = vld [vmem:[%s1 + $0x38] sm:$0xf]
  %v50 = vld [vmem:[%s1 + $0x3c] sm:$0xf]
  %v51 = vld [vmem:[%s1 + $0x40] sm:$0xf]
  %v52 = vld [vmem:[%s1 + $0x44] sm:$0xf]
  %v53 = vld [vmem:[%s1 + $0x48] sm:$0xf]
  %v54 = vld [vmem:[%s1 + $0x4c] sm:$0xf]
  %v55 = vld [vmem:[%s1 + $0x50] sm:$0xf]
  %v56 = vld [vmem:[%s1 + $0x54] sm:$0xf]
  %v57 = vld [vmem:[%s1 + $0x58] sm:$0xf]
  %v58 = vld [vmem:[%s1 + $0x5c] sm:$0xf]
  %v59 = vld [vmem:[%s1 + $0x60] sm:$0xf]
  %v60 = vld [vmem:[%s1 + $0x64] sm:$0xf]
  %v61 = vld [vmem:[%s1 + $0x68] sm:$0xf]
  %v62 = vld [vmem:[%s1 + $0x6c] sm:$0xf]
  %v63 = vld [vmem:[%s1 + $0x70] sm:$0xf]
  %v64 = vld [vmem:[%s1 + $0x74] sm:$0xf]
  %v65 = vld [vmem:[%s1 + $0x78] sm:$0xf]
  %v66 = vld [vmem:[%s1 + $0x7c] sm:$0xf]
  %v67 = vld [vmem:[%s1 + $0x80] sm:$0xf]
  %v68 = vld [vmem:[%s1 + $0x84] sm:$0xf]
  %v69 = vld [vmem:[%s1 + $0x88] sm:$0xf]
  %v70 = vld [vmem:[%s1 + $0x8c] sm:$0xf]
  %v71 = vld [vmem:[%s1 + $0x90] sm:$0xf]
  %v72 = vld [vmem:[%s1 + $0x94] sm:$0xf]
  %v73 = vld [vmem:[%s1 + $0x98] sm:$0xf]
  %v74 = vld [vmem:[%s1 + $0x9c] sm:$0xf]
  %v75 = vld [vmem:[%s1 + $0xa0] sm:$0xf]
  %v76 = vld [vmem:[%s1 + $0xa4] sm:$0xf]
  %v77 = vld [vmem:[%s1 + $0xa8] sm:$0xf]
  %v78 = vld [vmem:[%s1 + $0xac] sm:$0xf]
  %v79 = vld [vmem:[%s1 + $0xb0] sm:$0xf]
  %v80 = vld [vmem:[%s1 + $0xb4] sm:$0xf]
  %v81 = vld [vmem:[%s1 + $0xb8] sm:$0xf]
  %v82 = vld [vmem:[%s1 + $0xbc] sm:$0xf]
  %v83 = vld [vmem:[%s1 + $0xc0] sm:$0xf]
  %v84 = vld [vmem:[%s1 + $0xc4] sm:$0xf]
  %v85 = vld [vmem:[%s1 + $0xc8] sm:$0xf]
  %v86 = vld [vmem:[%s1 + $0xcc] sm:$0xf]
  %v87 = vld [vmem:[%s1 + $0xd0] sm:$0xf]
  %v88 = vld [vmem:[%s1 + $0xd4] sm:$0xf]
  %v89 = vld [vmem:[%s1 + $0xd8] sm:$0xf]
  %v90 = vld [vmem:[%s1 + $0xdc] sm:$0xf]
  %v91 = vld [vmem:[%s1 + $0xe0] sm:$0xf]
  %v92 = vld [vmem:[%s1 + $0xe4] sm:$0xf]
  %v93 = vld [vmem:[%s1 + $0xe8] sm:$0xf]
  %v94 = vld [vmem:[%s1 + $0xec] sm:$0xf]
  %v95 = vld [vmem:[%s1 + $0xf0] sm:$0xf]
  %v96 = vld [vmem:[%s1 + $0xf4] sm:$0xf]
  %v97 = vld [vmem:[%s1 + $0xf8] sm:$0xf]
  %v98 = vld [vmem:[%s1 + $0xfc] sm:$0xf]
  %v107 = vunpack.c.l.b16 %v27
  %v108 = vunpack.c.h.b16 %v27
  %v109 = vunpack.c.l.b16 %v28
  %v110 = vunpack.c.h.b16 %v28
  %v111 = vunpack.c.l.b16 %v29
  %v112 = vunpack.c.h.b16 %v29
  %v113 = vunpack.c.l.b16 %v30
  %v114 = vunpack.c.h.b16 %v30
  %v115 = vunpack.c.l.b16 %v31
  %v116 = vunpack.c.h.b16 %v31
  %v117 = vunpack.c.l.b16 %v32
  %v118 = vunpack.c.h.b16 %v32
  %v119 = vunpack.c.l.b16 %v33
  %v120 = vunpack.c.h.b16 %v33
  %v121 = vunpack.c.l.b16 %v34
  %v122 = vunpack.c.h.b16 %v34
  %v123 = vpack.c.b16 %v111, %v107
  %v124 = vpack.c.b16 %v112, %v108
  %v125 = vpack.c.b16 %v113, %v109
  %v126 = vpack.c.b16 %v114, %v110
  %v127 = vpack.c.b16 %v119, %v115
  %v128 = vpack.c.b16 %v120, %v116
  %v129 = vpack.c.b16 %v121, %v117
  %v130 = vpack.c.b16 %v122, %v118
  %v203 = vunpack.c.l.b16 %v35
  %v204 = vunpack.c.l.b16 %v36
  %v205 = vunpack.c.l.b16 %v37
  %v206 = vunpack.c.l.b16 %v38
  %v207 = vunpack.c.l.b16 %v39
  %v208 = vunpack.c.l.b16 %v40
  %v209 = vunpack.c.l.b16 %v41
  %v210 = vunpack.c.l.b16 %v42
  %v211 = vunpack.c.l.b16 %v43
  %v212 = vunpack.c.l.b16 %v44
  %v213 = vunpack.c.l.b16 %v45
  %v214 = vunpack.c.l.b16 %v46
  %v215 = vunpack.c.l.b16 %v47
  %v216 = vunpack.c.l.b16 %v48
  %v217 = vunpack.c.l.b16 %v49
  %v218 = vunpack.c.l.b16 %v50
  %v219 = vunpack.c.l.b16 %v51
  %v220 = vunpack.c.l.b16 %v52
  %v221 = vunpack.c.l.b16 %v53
  %v222 = vunpack.c.l.b16 %v54
  %v223 = vunpack.c.l.b16 %v55
  %v224 = vunpack.c.l.b16 %v56
  %v225 = vunpack.c.l.b16 %v57
  %v226 = vunpack.c.l.b16 %v58
  %v227 = vunpack.c.l.b16 %v59
  %v228 = vunpack.c.l.b16 %v60
  %v229 = vunpack.c.l.b16 %v61
  %v230 = vunpack.c.l.b16 %v62
  %v231 = vunpack.c.l.b16 %v63
  %v232 = vunpack.c.l.b16 %v64
  %v233 = vunpack.c.l.b16 %v65
  %v234 = vunpack.c.l.b16 %v66
  %v235 = vunpack.c.l.b16 %v67
  %v236 = vunpack.c.l.b16 %v68
  %v237 = vunpack.c.l.b16 %v69
  %v238 = vunpack.c.l.b16 %v70
  %v239 = vunpack.c.l.b16 %v71
  %v240 = vunpack.c.l.b16 %v72
  %v241 = vunpack.c.l.b16 %v73
  %v242 = vunpack.c.l.b16 %v74
  %v243 = vunpack.c.l.b16 %v75
  %v244 = vunpack.c.l.b16 %v76
  %v245 = vunpack.c.l.b16 %v77
  %v246 = vunpack.c.l.b16 %v78
  %v247 = vunpack.c.l.b16 %v79
  %v248 = vunpack.c.l.b16 %v80
  %v249 = vunpack.c.l.b16 %v81
  %v250 = vunpack.c.l.b16 %v82
  %v251 = vunpack.c.l.b16 %v83
  %v252 = vunpack.c.l.b16 %v84
  %v253 = vunpack.c.l.b16 %v85
  %v254 = vunpack.c.l.b16 %v86
  %v255 = vunpack.c.l.b16 %v87
  %v256 = vunpack.c.l.b16 %v88
  %v257 = vunpack.c.l.b16 %v89
  %v258 = vunpack.c.l.b16 %v90
  %v259 = vunpack.c.l.b16 %v91
  %v260 = vunpack.c.l.b16 %v92
  %v261 = vunpack.c.l.b16 %v93
  %v262 = vunpack.c.l.b16 %v94
  %v263 = vunpack.c.l.b16 %v95
  %v264 = vunpack.c.l.b16 %v96
  %v265 = vunpack.c.l.b16 %v97
  %v266 = vunpack.c.l.b16 %v98
  %v267 = vpack.c.b16 %v204, %v203
  %v268 = vpack.c.b16 %v206, %v205
  %v269 = vpack.c.b16 %v208, %v207
  %v270 = vpack.c.b16 %v210, %v209
  %v271 = vpack.c.b16 %v212, %v211
  %v272 = vpack.c.b16 %v214, %v213
  %v273 = vpack.c.b16 %v216, %v215
  %v274 = vpack.c.b16 %v218, %v217
  %v275 = vpack.c.b16 %v220, %v219
  %v276 = vpack.c.b16 %v222, %v221
  %v277 = vpack.c.b16 %v224, %v223
  %v278 = vpack.c.b16 %v226, %v225
  %v279 = vpack.c.b16 %v228, %v227
  %v280 = vpack.c.b16 %v230, %v229
  %v281 = vpack.c.b16 %v232, %v231
  %v282 = vpack.c.b16 %v234, %v233
  %v283 = vpack.c.b16 %v236, %v235
  %v284 = vpack.c.b16 %v238, %v237
  %v285 = vpack.c.b16 %v240, %v239
  %v286 = vpack.c.b16 %v242, %v241
  %v287 = vpack.c.b16 %v244, %v243
  %v288 = vpack.c.b16 %v246, %v245
  %v289 = vpack.c.b16 %v248, %v247
  %v290 = vpack.c.b16 %v250, %v249
  %v291 = vpack.c.b16 %v252, %v251
  %v292 = vpack.c.b16 %v254, %v253
  %v293 = vpack.c.b16 %v256, %v255
  %v294 = vpack.c.b16 %v258, %v257
  %v295 = vpack.c.b16 %v260, %v259
  %v296 = vpack.c.b16 %v262, %v261
  %v297 = vpack.c.b16 %v264, %v263
  %v298 = vpack.c.b16 %v266, %v265
  %331 = vmatprep.subr.bf16.mxu0 0
  %332 = vmatpush1.bf16.msra.mxu0 %v274
  %333 = vmatprep.subr.bf16.mxu0 0
  %334 = vmatpush1.bf16.msra.mxu0 %v273
  %335 = vmatprep.subr.bf16.mxu0 0
  %336 = vmatpush1.bf16.msra.mxu0 %v272
  %337 = vmatprep.subr.bf16.mxu0 0
  %338 = vmatpush1.bf16.msra.mxu0 %v271
  %339 = vmatprep.subr.bf16.mxu0 0
  %340 = vmatpush1.bf16.msra.mxu0 %v270
  %341 = vmatprep.subr.bf16.mxu0 0
  %342 = vmatpush1.bf16.msra.mxu0 %v269
  %343 = vmatprep.subr.bf16.mxu0 0
  %344 = vmatpush1.bf16.msra.mxu0 %v268
  %345 = vmatprep.subr.bf16.mxu0 0
  %346 = vmatpush1.bf16.msra.mxu0 %v267
  %347 = vmatprep.subr.bf16.mxu0 0
  %348 = vmatpush2.bf16.msra.mxu0 %v282
  %349 = vmatprep.subr.bf16.mxu0 0
  %350 = vmatpush2.bf16.msra.mxu0 %v281
  %351 = vmatprep.subr.bf16.mxu0 0
  %352 = vmatpush2.bf16.msra.mxu0 %v280
  %353 = vmatprep.subr.bf16.mxu0 0
  %354 = vmatpush2.bf16.msra.mxu0 %v279
  %355 = vmatprep.subr.bf16.mxu0 0
  %356 = vmatpush2.bf16.msra.mxu0 %v278
  %357 = vmatprep.subr.bf16.mxu0 0
  %358 = vmatpush2.bf16.msra.mxu0 %v277
  %359 = vmatprep.subr.bf16.mxu0 0
  %360 = vmatpush2.bf16.msra.mxu0 %v276
  %361 = vmatprep.subr.bf16.mxu0 0
  %362 = vmatpush2.bf16.msra.mxu0 %v275
  %363 = vmatprep.mubr.bf16.mxu0 %v124
  %364 = vmatmul.mubr.bf16.gmra.mxu0 %v123
  %v365 = vpop.f32.mrf.mxu0
  %v366 = vadd.f32 0.0, %v365
  %v367 = vpop.f32.mrf.mxu0
  %v368 = vpop.f32.mrf.mxu0
  %v369 = vadd.f32 0.0, %v368
  %v370 = vpop.f32.mrf.mxu0
  %371 = vmatprep.mubr.bf16.mxu0 %v128
  %372 = vmatmul.mubr.bf16.gmra.mxu0 %v127
  %v373 = vpop.f32.mrf.mxu0
  %v374 = vadd.f32 0.0, %v373
  %v375 = vpop.f32.mrf.mxu0
  %v376 = vpop.f32.mrf.mxu0
  %v377 = vadd.f32 0.0, %v376
  %v378 = vpop.f32.mrf.mxu0
  %379 = vdwg.mxu0
  %380 = vmatprep.subr.bf16.mxu0 0
  %381 = vmatpush1.bf16.msra.mxu0 %v290
  %382 = vmatprep.subr.bf16.mxu0 0
  %383 = vmatpush1.bf16.msra.mxu0 %v289
  %384 = vmatprep.subr.bf16.mxu0 0
  %385 = vmatpush1.bf16.msra.mxu0 %v288
  %386 = vmatprep.subr.bf16.mxu0 0
  %387 = vmatpush1.bf16.msra.mxu0 %v287
  %388 = vmatprep.subr.bf16.mxu0 0
  %389 = vmatpush1.bf16.msra.mxu0 %v286
  %390 = vmatprep.subr.bf16.mxu0 0
  %391 = vmatpush1.bf16.msra.mxu0 %v285
  %392 = vmatprep.subr.bf16.mxu0 0
  %393 = vmatpush1.bf16.msra.mxu0 %v284
  %394 = vmatprep.subr.bf16.mxu0 0
  %395 = vmatpush1.bf16.msra.mxu0 %v283
  %396 = vmatprep.subr.bf16.mxu0 0
  %397 = vmatpush2.bf16.msra.mxu0 %v298
  %398 = vmatprep.subr.bf16.mxu0 0
  %399 = vmatpush2.bf16.msra.mxu0 %v297
  %400 = vmatprep.subr.bf16.mxu0 0
  %401 = vmatpush2.bf16.msra.mxu0 %v296
  %402 = vmatprep.subr.bf16.mxu0 0
  %403 = vmatpush2.bf16.msra.mxu0 %v295
  %404 = vmatprep.subr.bf16.mxu0 0
  %405 = vmatpush2.bf16.msra.mxu0 %v294
  %406 = vmatprep.subr.bf16.mxu0 0
  %407 = vmatpush2.bf16.msra.mxu0 %v293
  %408 = vmatprep.subr.bf16.mxu0 0
  %409 = vmatpush2.bf16.msra.mxu0 %v292
  %410 = vmatprep.subr.bf16.mxu0 0
  %411 = vmatpush2.bf16.msra.mxu0 %v291
  %412 = vmatprep.mubr.bf16.mxu0 %v126
  %413 = vmatmul.mubr.bf16.gmra.mxu0 %v125
  %v414 = vpop.f32.mrf.mxu0
  %v415 = vadd.f32 %v366, %v414
  %v416 = vpop.f32.mrf.mxu0
  %v417 = vpop.f32.mrf.mxu0
  %v418 = vadd.f32 %v369, %v417
  %v419 = vpop.f32.mrf.mxu0
  %420 = vmatprep.mubr.bf16.mxu0 %v130
  %421 = vmatmul.mubr.bf16.gmra.mxu0 %v129
  %v422 = vpop.f32.mrf.mxu0
  %v423 = vadd.f32 %v374, %v422
  %v424 = vpop.f32.mrf.mxu0
  %v425 = vpop.f32.mrf.mxu0
  %v426 = vadd.f32 %v377, %v425
  %v427 = vpop.f32.mrf.mxu0
  %428 = vdwg.mxu0
  %v429 = vadd.f32 %v23, %v415
  %v430 = vadd.f32 %v24, %v418
  %v431 = vadd.f32 %v25, %v423
  %v432 = vadd.f32 %v26, %v426
  %433 = vst [vmem:[#allocation2] sm:$0xff] %v429
  %434 = vst [vmem:[#allocation2 + $0x8] sm:$0xff] %v430
  %435 = vst [vmem:[#allocation2 + $0x10] sm:$0xff] %v431
  %436 = vst [vmem:[#allocation2 + $0x18] sm:$0xff] %v432
  // Predicated region
  $region18: #{encoder_conv_forward.4} parent=0 // pred_check
    %p437 = pneg %p15
  $region19: #{encoder_conv_forward.4} parent=0 // pred_check_branch
    %439 = sbr.rel (%p437) target = $region21
  $region20: #{encoder_conv_forward.4} parent=0 // pred_region
    %v440 = vld [vmem:[#allocation2] sm:$0xff]
    %v441 = vld [vmem:[#allocation2 + $0x8] sm:$0xff]
    %v442 = vld [vmem:[#allocation2 + $0x10] sm:$0xff]
    %v443 = vld [vmem:[#allocation2 + $0x18] sm:$0xff]
    %v444 = vld [vmem:[%s2] sm:$0x1]
    %v446 = vlaneseq
    %v447 = vshrl.u32 %v446, 7
    %v448 = vsub.s32 0, %v447
    %v449 = vrot.slane %v444, %v448
    %v451 = vadd.f32 %v440, %v449
    %v452 = vadd.f32 %v441, %v449
    %v453 = vadd.f32 %v442, %v449
    %v454 = vadd.f32 %v443, %v449
    %vm455 = vcmp.ge.f32.partialorder %v451, 0.0
    %vm456 = vcmp.ge.f32.partialorder %v452, 0.0
    %vm457 = vcmp.ge.f32.partialorder %v453, 0.0
    %vm458 = vcmp.ge.f32.partialorder %v454, 0.0
    %v459 = vmul.f32 %v451, 0.2
    %v460 = vmul.f32 %v452, 0.2
    %v461 = vmul.f32 %v453, 0.2
    %v462 = vmul.f32 %v454, 0.2
    %v463 = vsel %vm455, %v451, %v459
    %v464 = vsel %vm456, %v452, %v460
    %v465 = vsel %vm457, %v453, %v461
    %v466 = vsel %vm458, %v454, %v462
    %v467 = vpack.c.bf16 %v464, %v463
    %v468 = vpack.c.bf16 %v466, %v465
    %v471 = vunpack.c.l.b16 %v467
    %v472 = vunpack.c.h.b16 %v467
    %v473 = vunpack.c.l.b16 %v468
    %v474 = vunpack.c.h.b16 %v468
    %v475 = vpack.c.b16 %v471, %v471
    %v476 = vpack.c.b16 %v472, %v472
    %v477 = vpack.c.b16 %v473, %v473
    %v478 = vpack.c.b16 %v474, %v474
    %483 = vst [vmem:[%s3] sm:$0xf] %v475
    %484 = vst [vmem:[%s3 + $0x4] sm:$0xf] %v476
    %485 = vst [vmem:[%s3 + $0x8] sm:$0xf] %v477
    %486 = vst [vmem:[%s3 + $0xc] sm:$0xf] %v478
  $region21: #{encoder_conv_forward.4} parent=0 // pred_fallthru
    _
  // Predicated region
  $region22: #{encoder_conv_forward.4} parent=0 // pred_check
    _
  $region23: #{encoder_conv_forward.4} parent=0 // pred_check_branch
    %488 = sbr.rel (0) target = $region25
  $region24: #{encoder_conv_forward.4} parent=0 // pred_region
    _
  $region25: #{encoder_conv_forward.4} parent=0 // pred_fallthru
    _
  // Predicated region
  $region26: #{encoder_conv_forward.4} parent=0 // pred_check
    _
  $region27: #{encoder_conv_forward.4} parent=0 // pred_check_branch
    %490 = sbr.rel (0) target = $region29
  $region28: #{encoder_conv_forward.4} parent=0 // pred_region
    _
  $region29: #{encoder_conv_forward.4} parent=0 // pred_fallthru
    _

// kernel: encoder_conv_forward.5
$region0: #{encoder_conv_forward.5}
  #allocation0 [shape = 'u32[]', space=smem, size = 0x4, offset = 0x4, fixed_abs, tag = 'smem constant byte address 0x4 - core index']
  #allocation1 [shape = 'u32[144,128]{1,0:T(1,128)}', space=vmem, size = 0x12000, scoped, tag = 'internal scratch']
  %s0 = inlined_call_operand.vmem [shape: bf16[16,1024], index: 0, kind: input, shape index: {}]
  %s1 = inlined_call_operand.vmem [shape: bf16[1024,512], index: 1, kind: input, shape index: {}]
  %s2 = inlined_call_operand.vmem [shape: f32[1,512], index: 2, kind: input, shape index: {}]
  %s3 = inlined_call_operand.vmem [shape: bf16[512,128], index: 3, kind: input, shape index: {}]
  %s4 = inlined_call_operand.vmem [shape: f32[1,128], index: 4, kind: input, shape index: {}]
  %s5 = inlined_call_operand.vmem [shape: f32[16,128], index: 5, kind: output, shape index: {}]
  %s6 = sld [smem:[#allocation0]]
  $region30: #{encoder_conv_forward.5} parent=0
    _
  %s8 = ssub.s32 1, %s6
  %s9 = scalar_select 0, %s8, %s6
  // Predicated region
  $region2: #{encoder_conv_forward.5} parent=0 // pred_check
    _
  $region3: #{encoder_conv_forward.5} parent=0 // pred_check_branch
    %11 = sbr.rel (0) target = $region5
  $region4: #{encoder_conv_forward.5} parent=0 // pred_region
    _
  $region5: #{encoder_conv_forward.5} parent=0 // pred_fallthru
    _
  // Predicated region
  $region6: #{encoder_conv_forward.5} parent=0 // pred_check
    _
  $region7: #{encoder_conv_forward.5} parent=0 // pred_check_branch
    %13 = sbr.rel (0) target = $region9
  $region8: #{encoder_conv_forward.5} parent=0 // pred_region
    _
  $region9: #{encoder_conv_forward.5} parent=0 // pred_fallthru
    _
  // Predicated region
  $region10: #{encoder_conv_forward.5} parent=0 // pred_check
    _
  $region11: #{encoder_conv_forward.5} parent=0 // pred_check_branch
    %15 = sbr.rel (0) target = $region13
  $region12: #{encoder_conv_forward.5} parent=0 // pred_region
    _
  $region13: #{encoder_conv_forward.5} parent=0 // pred_fallthru
    _
  // Predicated region
  $region14: #{encoder_conv_forward.5} parent=0 // pred_check
    _
  $region15: #{encoder_conv_forward.5} parent=0 // pred_check_branch
    %17 = sbr.rel (0) target = $region17
  $region16: #{encoder_conv_forward.5} parent=0 // pred_region
    _
  $region17: #{encoder_conv_forward.5} parent=0 // pred_fallthru
    _
  // Predicated region
  $region18: #{encoder_conv_forward.5} parent=0 // pred_check
    _
  $region19: #{encoder_conv_forward.5} parent=0 // pred_check_branch
    %19 = sbr.rel (0) target = $region21
  $region20: #{encoder_conv_forward.5} parent=0 // pred_region
    _
  $region21: #{encoder_conv_forward.5} parent=0 // pred_fallthru
    _
  %v21 = vld [vmem:[%s0] sm:$0xff]
  %v22 = vld [vmem:[%s0 + $0x8] sm:$0xff]
  %v23 = vld [vmem:[%s0 + $0x10] sm:$0xff]
  %v24 = vld [vmem:[%s0 + $0x18] sm:$0xff]
  %v25 = vld [vmem:[%s0 + $0x20] sm:$0xff]
  %v26 = vld [vmem:[%s0 + $0x28] sm:$0xff]
  %v27 = vld [vmem:[%s0 + $0x30] sm:$0xff]
  %v28 = vld [vmem:[%s0 + $0x38] sm:$0xff]
  %v29 = vld [vmem:[%s1] sm:$0xff]
  %v30 = vld [vmem:[%s1 + $0x8] sm:$0xff]
  %v31 = vld [vmem:[%s1 + $0x10] sm:$0xff]
  %v32 = vld [vmem:[%s1 + $0x18] sm:$0xff]
  %v33 = vld [vmem:[%s1 + $0x20] sm:$0xff]
  %v34 = vld [vmem:[%s1 + $0x28] sm:$0xff]
  %v35 = vld [vmem:[%s1 + $0x30] sm:$0xff]
  %v36 = vld [vmem:[%s1 + $0x38] sm:$0xff]
  %v37 = vld [vmem:[%s1 + $0x40] sm:$0xff]
  %v38 = vld [vmem:[%s1 + $0x48] sm:$0xff]
  %v39 = vld [vmem:[%s1 + $0x50] sm:$0xff]
  %v40 = vld [vmem:[%s1 + $0x58] sm:$0xff]
  %v41 = vld [vmem:[%s1 + $0x60] sm:$0xff]
  %v42 = vld [vmem:[%s1 + $0x68] sm:$0xff]
  %v43 = vld [vmem:[%s1 + $0x70] sm:$0xff]
  %v44 = vld [vmem:[%s1 + $0x78] sm:$0xff]
  %v45 = vld [vmem:[%s1 + $0x80] sm:$0xff]
  %v46 = vld [vmem:[%s1 + $0x88] sm:$0xff]
  %v47 = vld [vmem:[%s1 + $0x90] sm:$0xff]
  %v48 = vld [vmem:[%s1 + $0x98] sm:$0xff]
  %v49 = vld [vmem:[%s1 + $0xa0] sm:$0xff]
  %v50 = vld [vmem:[%s1 + $0xa8] sm:$0xff]
  %v51 = vld [vmem:[%s1 + $0xb0] sm:$0xff]
  %v52 = vld [vmem:[%s1 + $0xb8] sm:$0xff]
  %v53 = vld [vmem:[%s1 + $0xc0] sm:$0xff]
  %v54 = vld [vmem:[%s1 + $0xc8] sm:$0xff]
  %v55 = vld [vmem:[%s1 + $0xd0] sm:$0xff]
  %v56 = vld [vmem:[%s1 + $0xd8] sm:$0xff]
  %v57 = vld [vmem:[%s1 + $0xe0] sm:$0xff]
  %v58 = vld [vmem:[%s1 + $0xe8] sm:$0xff]
  %v59 = vld [vmem:[%s1 + $0xf0] sm:$0xff]
  %v60 = vld [vmem:[%s1 + $0xf8] sm:$0xff]
  %v61 = vld [vmem:[%s1 + $0x100] sm:$0xff]
  %v62 = vld [vmem:[%s1 + $0x108] sm:$0xff]
  %v63 = vld [vmem:[%s1 + $0x110] sm:$0xff]
  %v64 = vld [vmem:[%s1 + $0x118] sm:$0xff]
  %v65 = vld [vmem:[%s1 + $0x120] sm:$0xff]
  %v66 = vld [vmem:[%s1 + $0x128] sm:$0xff]
  %v67 = vld [vmem:[%s1 + $0x130] sm:$0xff]
  %v68 = vld [vmem:[%s1 + $0x138] sm:$0xff]
  %v69 = vld [vmem:[%s1 + $0x140] sm:$0xff]
  %v70 = vld [vmem:[%s1 + $0x148] sm:$0xff]
  %v71 = vld [vmem:[%s1 + $0x150] sm:$0xff]
  %v72 = vld [vmem:[%s1 + $0x158] sm:$0xff]
  %v73 = vld [vmem:[%s1 + $0x160] sm:$0xff]
  %v74 = vld [vmem:[%s1 + $0x168] sm:$0xff]
  %v75 = vld [vmem:[%s1 + $0x170] sm:$0xff]
  %v76 = vld [vmem:[%s1 + $0x178] sm:$0xff]
  %v77 = vld [vmem:[%s1 + $0x180] sm:$0xff]
  %v78 = vld [vmem:[%s1 + $0x188] sm:$0xff]
  %v79 = vld [vmem:[%s1 + $0x190] sm:$0xff]
  %v80 = vld [vmem:[%s1 + $0x198] sm:$0xff]
  %v81 = vld [vmem:[%s1 + $0x1a0] sm:$0xff]
  %v82 = vld [vmem:[%s1 + $0x1a8] sm:$0xff]
  %v83 = vld [vmem:[%s1 + $0x1b0] sm:$0xff]
  %v84 = vld [vmem:[%s1 + $0x1b8] sm:$0xff]
  %v85 = vld [vmem:[%s1 + $0x1c0] sm:$0xff]
  %v86 = vld [vmem:[%s1 + $0x1c8] sm:$0xff]
  %v87 = vld [vmem:[%s1 + $0x1d0] sm:$0xff]
  %v88 = vld [vmem:[%s1 + $0x1d8] sm:$0xff]
  %v89 = vld [vmem:[%s1 + $0x1e0] sm:$0xff]
  %v90 = vld [vmem:[%s1 + $0x1e8] sm:$0xff]
  %v91 = vld [vmem:[%s1 + $0x1f0] sm:$0xff]
  %v92 = vld [vmem:[%s1 + $0x1f8] sm:$0xff]
  %v93 = vld [vmem:[%s1 + $0x200] sm:$0xff]
  %v94 = vld [vmem:[%s1 + $0x208] sm:$0xff]
  %v95 = vld [vmem:[%s1 + $0x210] sm:$0xff]
  %v96 = vld [vmem:[%s1 + $0x218] sm:$0xff]
  %v97 = vld [vmem:[%s1 + $0x220] sm:$0xff]
  %v98 = vld [vmem:[%s1 + $0x228] sm:$0xff]
  %v99 = vld [vmem:[%s1 + $0x230] sm:$0xff]
  %v100 = vld [vmem:[%s1 + $0x238] sm:$0xff]
  %v101 = vld [vmem:[%s1 + $0x240] sm:$0xff]
  %v102 = vld [vmem:[%s1 + $0x248] sm:$0xff]
  %v103 = vld [vmem:[%s1 + $0x250] sm:$0xff]
  %v104 = vld [vmem:[%s1 + $0x258] sm:$0xff]
  %v105 = vld [vmem:[%s1 + $0x260] sm:$0xff]
  %v106 = vld [vmem:[%s1 + $0x268] sm:$0xff]
  %v107 = vld [vmem:[%s1 + $0x270] sm:$0xff]
  %v108 = vld [vmem:[%s1 + $0x278] sm:$0xff]
  %v109 = vld [vmem:[%s1 + $0x280] sm:$0xff]
  %v110 = vld [vmem:[%s1 + $0x288] sm:$0xff]
  %v111 = vld [vmem:[%s1 + $0x290] sm:$0xff]
  %v112 = vld [vmem:[%s1 + $0x298] sm:$0xff]
  %v113 = vld [vmem:[%s1 + $0x2a0] sm:$0xff]
  %v114 = vld [vmem:[%s1 + $0x2a8] sm:$0xff]
  %v115 = vld [vmem:[%s1 + $0x2b0] sm:$0xff]
  %v116 = vld [vmem:[%s1 + $0x2b8] sm:$0xff]
  %v117 = vld [vmem:[%s1 + $0x2c0] sm:$0xff]
  %v118 = vld [vmem:[%s1 + $0x2c8] sm:$0xff]
  %v119 = vld [vmem:[%s1 + $0x2d0] sm:$0xff]
  %v120 = vld [vmem:[%s1 + $0x2d8] sm:$0xff]
  %v121 = vld [vmem:[%s1 + $0x2e0] sm:$0xff]
  %v122 = vld [vmem:[%s1 + $0x2e8] sm:$0xff]
  %v123 = vld [vmem:[%s1 + $0x2f0] sm:$0xff]
  %v124 = vld [vmem:[%s1 + $0x2f8] sm:$0xff]
  %v125 = vld [vmem:[%s1 + $0x300] sm:$0xff]
  %v126 = vld [vmem:[%s1 + $0x308] sm:$0xff]
  %v127 = vld [vmem:[%s1 + $0x310] sm:$0xff]
  %v128 = vld [vmem:[%s1 + $0x318] sm:$0xff]
  %v129 = vld [vmem:[%s1 + $0x320] sm:$0xff]
  %v130 = vld [vmem:[%s1 + $0x328] sm:$0xff]
  %v131 = vld [vmem:[%s1 + $0x330] sm:$0xff]
  %v132 = vld [vmem:[%s1 + $0x338] sm:$0xff]
  %v133 = vld [vmem:[%s1 + $0x340] sm:$0xff]
  %v134 = vld [vmem:[%s1 + $0x348] sm:$0xff]
  %v135 = vld [vmem:[%s1 + $0x350] sm:$0xff]
  %v136 = vld [vmem:[%s1 + $0x358] sm:$0xff]
  %v137 = vld [vmem:[%s1 + $0x360] sm:$0xff]
  %v138 = vld [vmem:[%s1 + $0x368] sm:$0xff]
  %v139 = vld [vmem:[%s1 + $0x370] sm:$0xff]
  %v140 = vld [vmem:[%s1 + $0x378] sm:$0xff]
  %v141 = vld [vmem:[%s1 + $0x380] sm:$0xff]
  %v142 = vld [vmem:[%s1 + $0x388] sm:$0xff]
  %v143 = vld [vmem:[%s1 + $0x390] sm:$0xff]
  %v144 = vld [vmem:[%s1 + $0x398] sm:$0xff]
  %v145 = vld [vmem:[%s1 + $0x3a0] sm:$0xff]
  %v146 = vld [vmem:[%s1 + $0x3a8] sm:$0xff]
  %v147 = vld [vmem:[%s1 + $0x3b0] sm:$0xff]
  %v148 = vld [vmem:[%s1 + $0x3b8] sm:$0xff]
  %v149 = vld [vmem:[%s1 + $0x3c0] sm:$0xff]
  %v150 = vld [vmem:[%s1 + $0x3c8] sm:$0xff]
  %v151 = vld [vmem:[%s1 + $0x3d0] sm:$0xff]
  %v152 = vld [vmem:[%s1 + $0x3d8] sm:$0xff]
  %v153 = vld [vmem:[%s1 + $0x3e0] sm:$0xff]
  %v154 = vld [vmem:[%s1 + $0x3e8] sm:$0xff]
  %v155 = vld [vmem:[%s1 + $0x3f0] sm:$0xff]
  %v156 = vld [vmem:[%s1 + $0x3f8] sm:$0xff]
  %v157 = vld [vmem:[%s1 + $0x400] sm:$0xff]
  %v158 = vld [vmem:[%s1 + $0x408] sm:$0xff]
  %v159 = vld [vmem:[%s1 + $0x410] sm:$0xff]
  %v160 = vld [vmem:[%s1 + $0x418] sm:$0xff]
  %v161 = vld [vmem:[%s1 + $0x420] sm:$0xff]
  %v162 = vld [vmem:[%s1 + $0x428] sm:$0xff]
  %v163 = vld [vmem:[%s1 + $0x430] sm:$0xff]
  %v164 = vld [vmem:[%s1 + $0x438] sm:$0xff]
  %v165 = vld [vmem:[%s1 + $0x440] sm:$0xff]
  %v166 = vld [vmem:[%s1 + $0x448] sm:$0xff]
  %v167 = vld [vmem:[%s1 + $0x450] sm:$0xff]
  %v168 = vld [vmem:[%s1 + $0x458] sm:$0xff]
  %v169 = vld [vmem:[%s1 + $0x460] sm:$0xff]
  %v170 = vld [vmem:[%s1 + $0x468] sm:$0xff]
  %v171 = vld [vmem:[%s1 + $0x470] sm:$0xff]
  %v172 = vld [vmem:[%s1 + $0x478] sm:$0xff]
  %v173 = vld [vmem:[%s1 + $0x480] sm:$0xff]
  %v174 = vld [vmem:[%s1 + $0x488] sm:$0xff]
  %v175 = vld [vmem:[%s1 + $0x490] sm:$0xff]
  %v176 = vld [vmem:[%s1 + $0x498] sm:$0xff]
  %v177 = vld [vmem:[%s1 + $0x4a0] sm:$0xff]
  %v178 = vld [vmem:[%s1 + $0x4a8] sm:$0xff]
  %v179 = vld [vmem:[%s1 + $0x4b0] sm:$0xff]
  %v180 = vld [vmem:[%s1 + $0x4b8] sm:$0xff]
  %v181 = vld [vmem:[%s1 + $0x4c0] sm:$0xff]
  %v182 = vld [vmem:[%s1 + $0x4c8] sm:$0xff]
  %v183 = vld [vmem:[%s1 + $0x4d0] sm:$0xff]
  %v184 = vld [vmem:[%s1 + $0x4d8] sm:$0xff]
  %v185 = vld [vmem:[%s1 + $0x4e0] sm:$0xff]
  %v186 = vld [vmem:[%s1 + $0x4e8] sm:$0xff]
  %v187 = vld [vmem:[%s1 + $0x4f0] sm:$0xff]
  %v188 = vld [vmem:[%s1 + $0x4f8] sm:$0xff]
  %v189 = vld [vmem:[%s1 + $0x500] sm:$0xff]
  %v190 = vld [vmem:[%s1 + $0x508] sm:$0xff]
  %v191 = vld [vmem:[%s1 + $0x510] sm:$0xff]
  %v192 = vld [vmem:[%s1 + $0x518] sm:$0xff]
  %v193 = vld [vmem:[%s1 + $0x520] sm:$0xff]
  %v194 = vld [vmem:[%s1 + $0x528] sm:$0xff]
  %v195 = vld [vmem:[%s1 + $0x530] sm:$0xff]
  %v196 = vld [vmem:[%s1 + $0x538] sm:$0xff]
  %v197 = vld [vmem:[%s1 + $0x540] sm:$0xff]
  %v198 = vld [vmem:[%s1 + $0x548] sm:$0xff]
  %v199 = vld [vmem:[%s1 + $0x550] sm:$0xff]
  %v200 = vld [vmem:[%s1 + $0x558] sm:$0xff]
  %v201 = vld [vmem:[%s1 + $0x560] sm:$0xff]
  %v202 = vld [vmem:[%s1 + $0x568] sm:$0xff]
  %v203 = vld [vmem:[%s1 + $0x570] sm:$0xff]
  %v204 = vld [vmem:[%s1 + $0x578] sm:$0xff]
  %v205 = vld [vmem:[%s1 + $0x580] sm:$0xff]
  %v206 = vld [vmem:[%s1 + $0x588] sm:$0xff]
  %v207 = vld [vmem:[%s1 + $0x590] sm:$0xff]
  %v208 = vld [vmem:[%s1 + $0x598] sm:$0xff]
  %v209 = vld [vmem:[%s1 + $0x5a0] sm:$0xff]
  %v210 = vld [vmem:[%s1 + $0x5a8] sm:$0xff]
  %v211 = vld [vmem:[%s1 + $0x5b0] sm:$0xff]
  %v212 = vld [vmem:[%s1 + $0x5b8] sm:$0xff]
  %v213 = vld [vmem:[%s1 + $0x5c0] sm:$0xff]
  %v214 = vld [vmem:[%s1 + $0x5c8] sm:$0xff]
  %v215 = vld [vmem:[%s1 + $0x5d0] sm:$0xff]
  %v216 = vld [vmem:[%s1 + $0x5d8] sm:$0xff]
  %v217 = vld [vmem:[%s1 + $0x5e0] sm:$0xff]
  %v218 = vld [vmem:[%s1 + $0x5e8] sm:$0xff]
  %v219 = vld [vmem:[%s1 + $0x5f0] sm:$0xff]
  %v220 = vld [vmem:[%s1 + $0x5f8] sm:$0xff]
  %v221 = vld [vmem:[%s1 + $0x600] sm:$0xff]
  %v222 = vld [vmem:[%s1 + $0x608] sm:$0xff]
  %v223 = vld [vmem:[%s1 + $0x610] sm:$0xff]
  %v224 = vld [vmem:[%s1 + $0x618] sm:$0xff]
  %v225 = vld [vmem:[%s1 + $0x620] sm:$0xff]
  %v226 = vld [vmem:[%s1 + $0x628] sm:$0xff]
  %v227 = vld [vmem:[%s1 + $0x630] sm:$0xff]
  %v228 = vld [vmem:[%s1 + $0x638] sm:$0xff]
  %v229 = vld [vmem:[%s1 + $0x640] sm:$0xff]
  %v230 = vld [vmem:[%s1 + $0x648] sm:$0xff]
  %v231 = vld [vmem:[%s1 + $0x650] sm:$0xff]
  %v232 = vld [vmem:[%s1 + $0x658] sm:$0xff]
  %v233 = vld [vmem:[%s1 + $0x660] sm:$0xff]
  %v234 = vld [vmem:[%s1 + $0x668] sm:$0xff]
  %v235 = vld [vmem:[%s1 + $0x670] sm:$0xff]
  %v236 = vld [vmem:[%s1 + $0x678] sm:$0xff]
  %v237 = vld [vmem:[%s1 + $0x680] sm:$0xff]
  %v238 = vld [vmem:[%s1 + $0x688] sm:$0xff]
  %v239 = vld [vmem:[%s1 + $0x690] sm:$0xff]
  %v240 = vld [vmem:[%s1 + $0x698] sm:$0xff]
  %v241 = vld [vmem:[%s1 + $0x6a0] sm:$0xff]
  %v242 = vld [vmem:[%s1 + $0x6a8] sm:$0xff]
  %v243 = vld [vmem:[%s1 + $0x6b0] sm:$0xff]
  %v244 = vld [vmem:[%s1 + $0x6b8] sm:$0xff]
  %v245 = vld [vmem:[%s1 + $0x6c0] sm:$0xff]
  %v246 = vld [vmem:[%s1 + $0x6c8] sm:$0xff]
  %v247 = vld [vmem:[%s1 + $0x6d0] sm:$0xff]
  %v248 = vld [vmem:[%s1 + $0x6d8] sm:$0xff]
  %v249 = vld [vmem:[%s1 + $0x6e0] sm:$0xff]
  %v250 = vld [vmem:[%s1 + $0x6e8] sm:$0xff]
  %v251 = vld [vmem:[%s1 + $0x6f0] sm:$0xff]
  %v252 = vld [vmem:[%s1 + $0x6f8] sm:$0xff]
  %v253 = vld [vmem:[%s1 + $0x700] sm:$0xff]
  %v254 = vld [vmem:[%s1 + $0x708] sm:$0xff]
  %v255 = vld [vmem:[%s1 + $0x710] sm:$0xff]
  %v256 = vld [vmem:[%s1 + $0x718] sm:$0xff]
  %v257 = vld [vmem:[%s1 + $0x720] sm:$0xff]
  %v258 = vld [vmem:[%s1 + $0x728] sm:$0xff]
  %v259 = vld [vmem:[%s1 + $0x730] sm:$0xff]
  %v260 = vld [vmem:[%s1 + $0x738] sm:$0xff]
  %v261 = vld [vmem:[%s1 + $0x740] sm:$0xff]
  %v262 = vld [vmem:[%s1 + $0x748] sm:$0xff]
  %v263 = vld [vmem:[%s1 + $0x750] sm:$0xff]
  %v264 = vld [vmem:[%s1 + $0x758] sm:$0xff]
  %v265 = vld [vmem:[%s1 + $0x760] sm:$0xff]
  %v266 = vld [vmem:[%s1 + $0x768] sm:$0xff]
  %v267 = vld [vmem:[%s1 + $0x770] sm:$0xff]
  %v268 = vld [vmem:[%s1 + $0x778] sm:$0xff]
  %v269 = vld [vmem:[%s1 + $0x780] sm:$0xff]
  %v270 = vld [vmem:[%s1 + $0x788] sm:$0xff]
  %v271 = vld [vmem:[%s1 + $0x790] sm:$0xff]
  %v272 = vld [vmem:[%s1 + $0x798] sm:$0xff]
  %v273 = vld [vmem:[%s1 + $0x7a0] sm:$0xff]
  %v274 = vld [vmem:[%s1 + $0x7a8] sm:$0xff]
  %v275 = vld [vmem:[%s1 + $0x7b0] sm:$0xff]
  %v276 = vld [vmem:[%s1 + $0x7b8] sm:$0xff]
  %v277 = vld [vmem:[%s1 + $0x7c0] sm:$0xff]
  %v278 = vld [vmem:[%s1 + $0x7c8] sm:$0xff]
  %v279 = vld [vmem:[%s1 + $0x7d0] sm:$0xff]
  %v280 = vld [vmem:[%s1 + $0x7d8] sm:$0xff]
  %v281 = vld [vmem:[%s1 + $0x7e0] sm:$0xff]
  %v282 = vld [vmem:[%s1 + $0x7e8] sm:$0xff]
  %v283 = vld [vmem:[%s1 + $0x7f0] sm:$0xff]
  %v284 = vld [vmem:[%s1 + $0x7f8] sm:$0xff]
  %v285 = vld [vmem:[%s2] sm:$0xf]
  %v287 = vlaneseq
  %v288 = vshrl.u32 %v287, 7
  %v289 = vsub.s32 0, %v288
  %v290 = vrot.slane %v285, %v289
  %v291 = vlaneseq
  %v292 = vshrl.u32 %v291, 7
  %v293 = vsub.s32 1, %v292
  %v294 = vrot.slane %v285, %v293
  %v295 = vlaneseq
  %v296 = vshrl.u32 %v295, 7
  %v297 = vsub.s32 2, %v296
  %v298 = vrot.slane %v285, %v297
  %v299 = vlaneseq
  %v300 = vshrl.u32 %v299, 7
  %v301 = vsub.s32 3, %v300
  %v302 = vrot.slane %v285, %v301
  %v315 = vunpack.c.l.b16 %v21
  %v316 = vunpack.c.h.b16 %v21
  %v317 = vunpack.c.l.b16 %v22
  %v318 = vunpack.c.h.b16 %v22
  %v319 = vunpack.c.l.b16 %v23
  %v320 = vunpack.c.h.b16 %v23
  %v321 = vunpack.c.l.b16 %v24
  %v322 = vunpack.c.h.b16 %v24
  %v323 = vunpack.c.l.b16 %v25
  %v324 = vunpack.c.h.b16 %v25
  %v325 = vunpack.c.l.b16 %v26
  %v326 = vunpack.c.h.b16 %v26
  %v327 = vunpack.c.l.b16 %v27
  %v328 = vunpack.c.h.b16 %v27
  %v329 = vunpack.c.l.b16 %v28
  %v330 = vunpack.c.h.b16 %v28
  %v331 = vpack.c.b16 %v323, %v315
  %v332 = vpack.c.b16 %v324, %v316
  %v333 = vpack.c.b16 %v325, %v317
  %v334 = vpack.c.b16 %v326, %v318
  %v335 = vpack.c.b16 %v327, %v319
  %v336 = vpack.c.b16 %v328, %v320
  %v337 = vpack.c.b16 %v329, %v321
  %v338 = vpack.c.b16 %v330, %v322
  %v603 = vunpack.c.l.b16 %v29
  %v604 = vunpack.c.h.b16 %v29
  %v605 = vunpack.c.l.b16 %v30
  %v606 = vunpack.c.h.b16 %v30
  %v607 = vunpack.c.l.b16 %v31
  %v608 = vunpack.c.h.b16 %v31
  %v609 = vunpack.c.l.b16 %v32
  %v610 = vunpack.c.h.b16 %v32
  %v611 = vunpack.c.l.b16 %v33
  %v612 = vunpack.c.h.b16 %v33
  %v613 = vunpack.c.l.b16 %v34
  %v614 = vunpack.c.h.b16 %v34
  %v615 = vunpack.c.l.b16 %v35
  %v616 = vunpack.c.h.b16 %v35
  %v617 = vunpack.c.l.b16 %v36
  %v618 = vunpack.c.h.b16 %v36
  %v619 = vunpack.c.l.b16 %v37
  %v620 = vunpack.c.h.b16 %v37
  %v621 = vunpack.c.l.b16 %v38
  %v622 = vunpack.c.h.b16 %v38
  %v623 = vunpack.c.l.b16 %v39
  %v624 = vunpack.c.h.b16 %v39
  %v625 = vunpack.c.l.b16 %v40
  %v626 = vunpack.c.h.b16 %v40
  %v627 = vunpack.c.l.b16 %v41
  %v628 = vunpack.c.h.b16 %v41
  %v629 = vunpack.c.l.b16 %v42
  %v630 = vunpack.c.h.b16 %v42
  %v631 = vunpack.c.l.b16 %v43
  %v632 = vunpack.c.h.b16 %v43
  %v633 = vunpack.c.l.b16 %v44
  %v634 = vunpack.c.h.b16 %v44
  %v635 = vunpack.c.l.b16 %v45
  %v636 = vunpack.c.h.b16 %v45
  %v637 = vunpack.c.l.b16 %v46
  %v638 = vunpack.c.h.b16 %v46
  %v639 = vunpack.c.l.b16 %v47
  %v640 = vunpack.c.h.b16 %v47
  %v641 = vunpack.c.l.b16 %v48
  %v642 = vunpack.c.h.b16 %v48
  %v643 = vunpack.c.l.b16 %v49
  %v644 = vunpack.c.h.b16 %v49
  %v645 = vunpack.c.l.b16 %v50
  %v646 = vunpack.c.h.b16 %v50
  %v647 = vunpack.c.l.b16 %v51
  %v648 = vunpack.c.h.b16 %v51
  %v649 = vunpack.c.l.b16 %v52
  %v650 = vunpack.c.h.b16 %v52
  %v651 = vunpack.c.l.b16 %v53
  %v652 = vunpack.c.h.b16 %v53
  %v653 = vunpack.c.l.b16 %v54
  %v654 = vunpack.c.h.b16 %v54
  %v655 = vunpack.c.l.b16 %v55
  %v656 = vunpack.c.h.b16 %v55
  %v657 = vunpack.c.l.b16 %v56
  %v658 = vunpack.c.h.b16 %v56
  %v659 = vunpack.c.l.b16 %v57
  %v660 = vunpack.c.h.b16 %v57
  %v661 = vunpack.c.l.b16 %v58
  %v662 = vunpack.c.h.b16 %v58
  %v663 = vunpack.c.l.b16 %v59
  %v664 = vunpack.c.h.b16 %v59
  %v665 = vunpack.c.l.b16 %v60
  %v666 = vunpack.c.h.b16 %v60
  %v667 = vunpack.c.l.b16 %v61
  %v668 = vunpack.c.h.b16 %v61
  %v669 = vunpack.c.l.b16 %v62
  %v670 = vunpack.c.h.b16 %v62
  %v671 = vunpack.c.l.b16 %v63
  %v672 = vunpack.c.h.b16 %v63
  %v673 = vunpack.c.l.b16 %v64
  %v674 = vunpack.c.h.b16 %v64
  %v675 = vunpack.c.l.b16 %v65
  %v676 = vunpack.c.h.b16 %v65
  %v677 = vunpack.c.l.b16 %v66
  %v678 = vunpack.c.h.b16 %v66
  %v679 = vunpack.c.l.b16 %v67
  %v680 = vunpack.c.h.b16 %v67
  %v681 = vunpack.c.l.b16 %v68
  %v682 = vunpack.c.h.b16 %v68
  %v683 = vunpack.c.l.b16 %v69
  %v684 = vunpack.c.h.b16 %v69
  %v685 = vunpack.c.l.b16 %v70
  %v686 = vunpack.c.h.b16 %v70
  %v687 = vunpack.c.l.b16 %v71
  %v688 = vunpack.c.h.b16 %v71
  %v689 = vunpack.c.l.b16 %v72
  %v690 = vunpack.c.h.b16 %v72
  %v691 = vunpack.c.l.b16 %v73
  %v692 = vunpack.c.h.b16 %v73
  %v693 = vunpack.c.l.b16 %v74
  %v694 = vunpack.c.h.b16 %v74
  %v695 = vunpack.c.l.b16 %v75
  %v696 = vunpack.c.h.b16 %v75
  %v697 = vunpack.c.l.b16 %v76
  %v698 = vunpack.c.h.b16 %v76
  %v699 = vunpack.c.l.b16 %v77
  %v700 = vunpack.c.h.b16 %v77
  %v701 = vunpack.c.l.b16 %v78
  %v702 = vunpack.c.h.b16 %v78
  %v703 = vunpack.c.l.b16 %v79
  %v704 = vunpack.c.h.b16 %v79
  %v705 = vunpack.c.l.b16 %v80
  %v706 = vunpack.c.h.b16 %v80
  %v707 = vunpack.c.l.b16 %v81
  %v708 = vunpack.c.h.b16 %v81
  %v709 = vunpack.c.l.b16 %v82
  %v710 = vunpack.c.h.b16 %v82
  %v711 = vunpack.c.l.b16 %v83
  %v712 = vunpack.c.h.b16 %v83
  %v713 = vunpack.c.l.b16 %v84
  %v714 = vunpack.c.h.b16 %v84
  %v715 = vunpack.c.l.b16 %v85
  %v716 = vunpack.c.h.b16 %v85
  %v717 = vunpack.c.l.b16 %v86
  %v718 = vunpack.c.h.b16 %v86
  %v719 = vunpack.c.l.b16 %v87
  %v720 = vunpack.c.h.b16 %v87
  %v721 = vunpack.c.l.b16 %v88
  %v722 = vunpack.c.h.b16 %v88
  %v723 = vunpack.c.l.b16 %v89
  %v724 = vunpack.c.h.b16 %v89
  %v725 = vunpack.c.l.b16 %v90
  %v726 = vunpack.c.h.b16 %v90
  %v727 = vunpack.c.l.b16 %v91
  %v728 = vunpack.c.h.b16 %v91
  %v729 = vunpack.c.l.b16 %v92
  %v730 = vunpack.c.h.b16 %v92
  %v731 = vunpack.c.l.b16 %v93
  %v732 = vunpack.c.h.b16 %v93
  %v733 = vunpack.c.l.b16 %v94
  %v734 = vunpack.c.h.b16 %v94
  %v735 = vunpack.c.l.b16 %v95
  %v736 = vunpack.c.h.b16 %v95
  %v737 = vunpack.c.l.b16 %v96
  %v738 = vunpack.c.h.b16 %v96
  %v739 = vunpack.c.l.b16 %v97
  %v740 = vunpack.c.h.b16 %v97
  %v741 = vunpack.c.l.b16 %v98
  %v742 = vunpack.c.h.b16 %v98
  %v743 = vunpack.c.l.b16 %v99
  %v744 = vunpack.c.h.b16 %v99
  %v745 = vunpack.c.l.b16 %v100
  %v746 = vunpack.c.h.b16 %v100
  %v747 = vunpack.c.l.b16 %v101
  %v748 = vunpack.c.h.b16 %v101
  %v749 = vunpack.c.l.b16 %v102
  %v750 = vunpack.c.h.b16 %v102
  %v751 = vunpack.c.l.b16 %v103
  %v752 = vunpack.c.h.b16 %v103
  %v753 = vunpack.c.l.b16 %v104
  %v754 = vunpack.c.h.b16 %v104
  %v755 = vunpack.c.l.b16 %v105
  %v756 = vunpack.c.h.b16 %v105
  %v757 = vunpack.c.l.b16 %v106
  %v758 = vunpack.c.h.b16 %v106
  %v759 = vunpack.c.l.b16 %v107
  %v760 = vunpack.c.h.b16 %v107
  %v761 = vunpack.c.l.b16 %v108
  %v762 = vunpack.c.h.b16 %v108
  %v763 = vunpack.c.l.b16 %v109
  %v764 = vunpack.c.h.b16 %v109
  %v765 = vunpack.c.l.b16 %v110
  %v766 = vunpack.c.h.b16 %v110
  %v767 = vunpack.c.l.b16 %v111
  %v768 = vunpack.c.h.b16 %v111
  %v769 = vunpack.c.l.b16 %v112
  %v770 = vunpack.c.h.b16 %v112
  %v771 = vunpack.c.l.b16 %v113
  %v772 = vunpack.c.h.b16 %v113
  %v773 = vunpack.c.l.b16 %v114
  %v774 = vunpack.c.h.b16 %v114
  %v775 = vunpack.c.l.b16 %v115
  %v776 = vunpack.c.h.b16 %v115
  %v777 = vunpack.c.l.b16 %v116
  %v778 = vunpack.c.h.b16 %v116
  %v779 = vunpack.c.l.b16 %v117
  %v780 = vunpack.c.h.b16 %v117
  %v781 = vunpack.c.l.b16 %v118
  %v782 = vunpack.c.h.b16 %v118
  %v783 = vunpack.c.l.b16 %v119
  %v784 = vunpack.c.h.b16 %v119
  %v785 = vunpack.c.l.b16 %v120
  %v786 = vunpack.c.h.b16 %v120
  %v787 = vunpack.c.l.b16 %v121
  %v788 = vunpack.c.h.b16 %v121
  %v789 = vunpack.c.l.b16 %v122
  %v790 = vunpack.c.h.b16 %v122
  %v791 = vunpack.c.l.b16 %v123
  %v792 = vunpack.c.h.b16 %v123
  %v793 = vunpack.c.l.b16 %v124
  %v794 = vunpack.c.h.b16 %v124
  %v795 = vunpack.c.l.b16 %v125
  %v796 = vunpack.c.h.b16 %v125
  %v797 = vunpack.c.l.b16 %v126
  %v798 = vunpack.c.h.b16 %v126
  %v799 = vunpack.c.l.b16 %v127
  %v800 = vunpack.c.h.b16 %v127
  %v801 = vunpack.c.l.b16 %v128
  %v802 = vunpack.c.h.b16 %v128
  %v803 = vunpack.c.l.b16 %v129
  %v804 = vunpack.c.h.b16 %v129
  %v805 = vunpack.c.l.b16 %v130
  %v806 = vunpack.c.h.b16 %v130
  %v807 = vunpack.c.l.b16 %v131
  %v808 = vunpack.c.h.b16 %v131
  %v809 = vunpack.c.l.b16 %v132
  %v810 = vunpack.c.h.b16 %v132
  %v811 = vunpack.c.l.b16 %v133
  %v812 = vunpack.c.h.b16 %v133
  %v813 = vunpack.c.l.b16 %v134
  %v814 = vunpack.c.h.b16 %v134
  %v815 = vunpack.c.l.b16 %v135
  %v816 = vunpack.c.h.b16 %v135
  %v817 = vunpack.c.l.b16 %v136
  %v818 = vunpack.c.h.b16 %v136
  %v819 = vunpack.c.l.b16 %v137
  %v820 = vunpack.c.h.b16 %v137
  %v821 = vunpack.c.l.b16 %v138
  %v822 = vunpack.c.h.b16 %v138
  %v823 = vunpack.c.l.b16 %v139
  %v824 = vunpack.c.h.b16 %v139
  %v825 = vunpack.c.l.b16 %v140
  %v826 = vunpack.c.h.b16 %v140
  %v827 = vunpack.c.l.b16 %v141
  %v828 = vunpack.c.h.b16 %v141
  %v829 = vunpack.c.l.b16 %v142
  %v830 = vunpack.c.h.b16 %v142
  %v831 = vunpack.c.l.b16 %v143
  %v832 = vunpack.c.h.b16 %v143
  %v833 = vunpack.c.l.b16 %v144
  %v834 = vunpack.c.h.b16 %v144
  %v835 = vunpack.c.l.b16 %v145
  %v836 = vunpack.c.h.b16 %v145
  %v837 = vunpack.c.l.b16 %v146
  %v838 = vunpack.c.h.b16 %v146
  %v839 = vunpack.c.l.b16 %v147
  %v840 = vunpack.c.h.b16 %v147
  %v841 = vunpack.c.l.b16 %v148
  %v842 = vunpack.c.h.b16 %v148
  %v843 = vunpack.c.l.b16 %v149
  %v844 = vunpack.c.h.b16 %v149
  %v845 = vunpack.c.l.b16 %v150
  %v846 = vunpack.c.h.b16 %v150
  %v847 = vunpack.c.l.b16 %v151
  %v848 = vunpack.c.h.b16 %v151
  %v849 = vunpack.c.l.b16 %v152
  %v850 = vunpack.c.h.b16 %v152
  %v851 = vunpack.c.l.b16 %v153
  %v852 = vunpack.c.h.b16 %v153
  %v853 = vunpack.c.l.b16 %v154
  %v854 = vunpack.c.h.b16 %v154
  %v855 = vunpack.c.l.b16 %v155
  %v856 = vunpack.c.h.b16 %v155
  %v857 = vunpack.c.l.b16 %v156
  %v858 = vunpack.c.h.b16 %v156
  %v859 = vunpack.c.l.b16 %v157
  %v860 = vunpack.c.h.b16 %v157
  %v861 = vunpack.c.l.b16 %v158
  %v862 = vunpack.c.h.b16 %v158
  %v863 = vunpack.c.l.b16 %v159
  %v864 = vunpack.c.h.b16 %v159
  %v865 = vunpack.c.l.b16 %v160
  %v866 = vunpack.c.h.b16 %v160
  %v867 = vunpack.c.l.b16 %v161
  %v868 = vunpack.c.h.b16 %v161
  %v869 = vunpack.c.l.b16 %v162
  %v870 = vunpack.c.h.b16 %v162
  %v871 = vunpack.c.l.b16 %v163
  %v872 = vunpack.c.h.b16 %v163
  %v873 = vunpack.c.l.b16 %v164
  %v874 = vunpack.c.h.b16 %v164
  %v875 = vunpack.c.l.b16 %v165
  %v876 = vunpack.c.h.b16 %v165
  %v877 = vunpack.c.l.b16 %v166
  %v878 = vunpack.c.h.b16 %v166
  %v879 = vunpack.c.l.b16 %v167
  %v880 = vunpack.c.h.b16 %v167
  %v881 = vunpack.c.l.b16 %v168
  %v882 = vunpack.c.h.b16 %v168
  %v883 = vunpack.c.l.b16 %v169
  %v884 = vunpack.c.h.b16 %v169
  %v885 = vunpack.c.l.b16 %v170
  %v886 = vunpack.c.h.b16 %v170
  %v887 = vunpack.c.l.b16 %v171
  %v888 = vunpack.c.h.b16 %v171
  %v889 = vunpack.c.l.b16 %v172
  %v890 = vunpack.c.h.b16 %v172
  %v891 = vunpack.c.l.b16 %v173
  %v892 = vunpack.c.h.b16 %v173
  %v893 = vunpack.c.l.b16 %v174
  %v894 = vunpack.c.h.b16 %v174
  %v895 = vunpack.c.l.b16 %v175
  %v896 = vunpack.c.h.b16 %v175
  %v897 = vunpack.c.l.b16 %v176
  %v898 = vunpack.c.h.b16 %v176
  %v899 = vunpack.c.l.b16 %v177
  %v900 = vunpack.c.h.b16 %v177
  %v901 = vunpack.c.l.b16 %v178
  %v902 = vunpack.c.h.b16 %v178
  %v903 = vunpack.c.l.b16 %v179
  %v904 = vunpack.c.h.b16 %v179
  %v905 = vunpack.c.l.b16 %v180
  %v906 = vunpack.c.h.b16 %v180
  %v907 = vunpack.c.l.b16 %v181
  %v908 = vunpack.c.h.b16 %v181
  %v909 = vunpack.c.l.b16 %v182
  %v910 = vunpack.c.h.b16 %v182
  %v911 = vunpack.c.l.b16 %v183
  %v912 = vunpack.c.h.b16 %v183
  %v913 = vunpack.c.l.b16 %v184
  %v914 = vunpack.c.h.b16 %v184
  %v915 = vunpack.c.l.b16 %v185
  %v916 = vunpack.c.h.b16 %v185
  %v917 = vunpack.c.l.b16 %v186
  %v918 = vunpack.c.h.b16 %v186
  %v919 = vunpack.c.l.b16 %v187
  %v920 = vunpack.c.h.b16 %v187
  %v921 = vunpack.c.l.b16 %v188
  %v922 = vunpack.c.h.b16 %v188
  %v923 = vunpack.c.l.b16 %v189
  %v924 = vunpack.c.h.b16 %v189
  %v925 = vunpack.c.l.b16 %v190
  %v926 = vunpack.c.h.b16 %v190
  %v927 = vunpack.c.l.b16 %v191
  %v928 = vunpack.c.h.b16 %v191
  %v929 = vunpack.c.l.b16 %v192
  %v930 = vunpack.c.h.b16 %v192
  %v931 = vunpack.c.l.b16 %v193
  %v932 = vunpack.c.h.b16 %v193
  %v933 = vunpack.c.l.b16 %v194
  %v934 = vunpack.c.h.b16 %v194
  %v935 = vunpack.c.l.b16 %v195
  %v936 = vunpack.c.h.b16 %v195
  %v937 = vunpack.c.l.b16 %v196
  %v938 = vunpack.c.h.b16 %v196
  %v939 = vunpack.c.l.b16 %v197
  %v940 = vunpack.c.h.b16 %v197
  %v941 = vunpack.c.l.b16 %v198
  %v942 = vunpack.c.h.b16 %v198
  %v943 = vunpack.c.l.b16 %v199
  %v944 = vunpack.c.h.b16 %v199
  %v945 = vunpack.c.l.b16 %v200
  %v946 = vunpack.c.h.b16 %v200
  %v947 = vunpack.c.l.b16 %v201
  %v948 = vunpack.c.h.b16 %v201
  %v949 = vunpack.c.l.b16 %v202
  %v950 = vunpack.c.h.b16 %v202
  %v951 = vunpack.c.l.b16 %v203
  %v952 = vunpack.c.h.b16 %v203
  %v953 = vunpack.c.l.b16 %v204
  %v954 = vunpack.c.h.b16 %v204
  %v955 = vunpack.c.l.b16 %v205
  %v956 = vunpack.c.h.b16 %v205
  %v957 = vunpack.c.l.b16 %v206
  %v958 = vunpack.c.h.b16 %v206
  %v959 = vunpack.c.l.b16 %v207
  %v960 = vunpack.c.h.b16 %v207
  %v961 = vunpack.c.l.b16 %v208
  %v962 = vunpack.c.h.b16 %v208
  %v963 = vunpack.c.l.b16 %v209
  %v964 = vunpack.c.h.b16 %v209
  %v965 = vunpack.c.l.b16 %v210
  %v966 = vunpack.c.h.b16 %v210
  %v967 = vunpack.c.l.b16 %v211
  %v968 = vunpack.c.h.b16 %v211
  %v969 = vunpack.c.l.b16 %v212
  %v970 = vunpack.c.h.b16 %v212
  %v971 = vunpack.c.l.b16 %v213
  %v972 = vunpack.c.h.b16 %v213
  %v973 = vunpack.c.l.b16 %v214
  %v974 = vunpack.c.h.b16 %v214
  %v975 = vunpack.c.l.b16 %v215
  %v976 = vunpack.c.h.b16 %v215
  %v977 = vunpack.c.l.b16 %v216
  %v978 = vunpack.c.h.b16 %v216
  %v979 = vunpack.c.l.b16 %v217
  %v980 = vunpack.c.h.b16 %v217
  %v981 = vunpack.c.l.b16 %v218
  %v982 = vunpack.c.h.b16 %v218
  %v983 = vunpack.c.l.b16 %v219
  %v984 = vunpack.c.h.b16 %v219
  %v985 = vunpack.c.l.b16 %v220
  %v986 = vunpack.c.h.b16 %v220
  %v987 = vunpack.c.l.b16 %v221
  %v988 = vunpack.c.h.b16 %v221
  %v989 = vunpack.c.l.b16 %v222
  %v990 = vunpack.c.h.b16 %v222
  %v991 = vunpack.c.l.b16 %v223
  %v992 = vunpack.c.h.b16 %v223
  %v993 = vunpack.c.l.b16 %v224
  %v994 = vunpack.c.h.b16 %v224
  %v995 = vunpack.c.l.b16 %v225
  %v996 = vunpack.c.h.b16 %v225
  %v997 = vunpack.c.l.b16 %v226
  %v998 = vunpack.c.h.b16 %v226
  %v999 = vunpack.c.l.b16 %v227
  %v1000 = vunpack.c.h.b16 %v227
  %v1001 = vunpack.c.l.b16 %v228
  %v1002 = vunpack.c.h.b16 %v228
  %v1003 = vunpack.c.l.b16 %v229
  %v1004 = vunpack.c.h.b16 %v229
  %v1005 = vunpack.c.l.b16 %v230
  %v1006 = vunpack.c.h.b16 %v230
  %v1007 = vunpack.c.l.b16 %v231
  %v1008 = vunpack.c.h.b16 %v231
  %v1009 = vunpack.c.l.b16 %v232
  %v1010 = vunpack.c.h.b16 %v232
  %v1011 = vunpack.c.l.b16 %v233
  %v1012 = vunpack.c.h.b16 %v233
  %v1013 = vunpack.c.l.b16 %v234
  %v1014 = vunpack.c.h.b16 %v234
  %v1015 = vunpack.c.l.b16 %v235
  %v1016 = vunpack.c.h.b16 %v235
  %v1017 = vunpack.c.l.b16 %v236
  %v1018 = vunpack.c.h.b16 %v236
  %v1019 = vunpack.c.l.b16 %v237
  %v1020 = vunpack.c.h.b16 %v237
  %v1021 = vunpack.c.l.b16 %v238
  %v1022 = vunpack.c.h.b16 %v238
  %v1023 = vunpack.c.l.b16 %v239
  %v1024 = vunpack.c.h.b16 %v239
  %v1025 = vunpack.c.l.b16 %v240
  %v1026 = vunpack.c.h.b16 %v240
  %v1027 = vunpack.c.l.b16 %v241
  %v1028 = vunpack.c.h.b16 %v241
  %v1029 = vunpack.c.l.b16 %v242
  %v1030 = vunpack.c.h.b16 %v242
  %v1031 = vunpack.c.l.b16 %v243
  %v1032 = vunpack.c.h.b16 %v243
  %v1033 = vunpack.c.l.b16 %v244
  %v1034 = vunpack.c.h.b16 %v244
  %v1035 = vunpack.c.l.b16 %v245
  %v1036 = vunpack.c.h.b16 %v245
  %v1037 = vunpack.c.l.b16 %v246
  %v1038 = vunpack.c.h.b16 %v246
  %v1039 = vunpack.c.l.b16 %v247
  %v1040 = vunpack.c.h.b16 %v247
  %v1041 = vunpack.c.l.b16 %v248
  %v1042 = vunpack.c.h.b16 %v248
  %v1043 = vunpack.c.l.b16 %v249
  %v1044 = vunpack.c.h.b16 %v249
  %v1045 = vunpack.c.l.b16 %v250
  %v1046 = vunpack.c.h.b16 %v250
  %v1047 = vunpack.c.l.b16 %v251
  %v1048 = vunpack.c.h.b16 %v251
  %v1049 = vunpack.c.l.b16 %v252
  %v1050 = vunpack.c.h.b16 %v252
  %v1051 = vunpack.c.l.b16 %v253
  %v1052 = vunpack.c.h.b16 %v253
  %v1053 = vunpack.c.l.b16 %v254
  %v1054 = vunpack.c.h.b16 %v254
  %v1055 = vunpack.c.l.b16 %v255
  %v1056 = vunpack.c.h.b16 %v255
  %v1057 = vunpack.c.l.b16 %v256
  %v1058 = vunpack.c.h.b16 %v256
  %v1059 = vunpack.c.l.b16 %v257
  %v1060 = vunpack.c.h.b16 %v257
  %v1061 = vunpack.c.l.b16 %v258
  %v1062 = vunpack.c.h.b16 %v258
  %v1063 = vunpack.c.l.b16 %v259
  %v1064 = vunpack.c.h.b16 %v259
  %v1065 = vunpack.c.l.b16 %v260
  %v1066 = vunpack.c.h.b16 %v260
  %v1067 = vunpack.c.l.b16 %v261
  %v1068 = vunpack.c.h.b16 %v261
  %v1069 = vunpack.c.l.b16 %v262
  %v1070 = vunpack.c.h.b16 %v262
  %v1071 = vunpack.c.l.b16 %v263
  %v1072 = vunpack.c.h.b16 %v263
  %v1073 = vunpack.c.l.b16 %v264
  %v1074 = vunpack.c.h.b16 %v264
  %v1075 = vunpack.c.l.b16 %v265
  %v1076 = vunpack.c.h.b16 %v265
  %v1077 = vunpack.c.l.b16 %v266
  %v1078 = vunpack.c.h.b16 %v266
  %v1079 = vunpack.c.l.b16 %v267
  %v1080 = vunpack.c.h.b16 %v267
  %v1081 = vunpack.c.l.b16 %v268
  %v1082 = vunpack.c.h.b16 %v268
  %v1083 = vunpack.c.l.b16 %v269
  %v1084 = vunpack.c.h.b16 %v269
  %v1085 = vunpack.c.l.b16 %v270
  %v1086 = vunpack.c.h.b16 %v270
  %v1087 = vunpack.c.l.b16 %v271
  %v1088 = vunpack.c.h.b16 %v271
  %v1089 = vunpack.c.l.b16 %v272
  %v1090 = vunpack.c.h.b16 %v272
  %v1091 = vunpack.c.l.b16 %v273
  %v1092 = vunpack.c.h.b16 %v273
  %v1093 = vunpack.c.l.b16 %v274
  %v1094 = vunpack.c.h.b16 %v274
  %v1095 = vunpack.c.l.b16 %v275
  %v1096 = vunpack.c.h.b16 %v275
  %v1097 = vunpack.c.l.b16 %v276
  %v1098 = vunpack.c.h.b16 %v276
  %v1099 = vunpack.c.l.b16 %v277
  %v1100 = vunpack.c.h.b16 %v277
  %v1101 = vunpack.c.l.b16 %v278
  %v1102 = vunpack.c.h.b16 %v278
  %v1103 = vunpack.c.l.b16 %v279
  %v1104 = vunpack.c.h.b16 %v279
  %v1105 = vunpack.c.l.b16 %v280
  %v1106 = vunpack.c.h.b16 %v280
  %v1107 = vunpack.c.l.b16 %v281
  %v1108 = vunpack.c.h.b16 %v281
  %v1109 = vunpack.c.l.b16 %v282
  %v1110 = vunpack.c.h.b16 %v282
  %v1111 = vunpack.c.l.b16 %v283
  %v1112 = vunpack.c.h.b16 %v283
  %v1113 = vunpack.c.l.b16 %v284
  %v1114 = vunpack.c.h.b16 %v284
  %v1115 = vpack.c.b16 %v607, %v603
  %v1116 = vpack.c.b16 %v608, %v604
  %v1117 = vpack.c.b16 %v609, %v605
  %v1118 = vpack.c.b16 %v610, %v606
  %v1119 = vpack.c.b16 %v615, %v611
  %v1120 = vpack.c.b16 %v616, %v612
  %v1121 = vpack.c.b16 %v617, %v613
  %v1122 = vpack.c.b16 %v618, %v614
  %v1123 = vpack.c.b16 %v623, %v619
  %v1124 = vpack.c.b16 %v624, %v620
  %v1125 = vpack.c.b16 %v625, %v621
  %v1126 = vpack.c.b16 %v626, %v622
  %v1127 = vpack.c.b16 %v631, %v627
  %v1128 = vpack.c.b16 %v632, %v628
  %v1129 = vpack.c.b16 %v633, %v629
  %v1130 = vpack.c.b16 %v634, %v630
  %v1131 = vpack.c.b16 %v639, %v635
  %v1132 = vpack.c.b16 %v640, %v636
  %v1133 = vpack.c.b16 %v641, %v637
  %v1134 = vpack.c.b16 %v642, %v638
  %v1135 = vpack.c.b16 %v647, %v643
  %v1136 = vpack.c.b16 %v648, %v644
  %v1137 = vpack.c.b16 %v649, %v645
  %v1138 = vpack.c.b16 %v650, %v646
  %v1139 = vpack.c.b16 %v655, %v651
  %v1140 = vpack.c.b16 %v656, %v652
  %v1141 = vpack.c.b16 %v657, %v653
  %v1142 = vpack.c.b16 %v658, %v654
  %v1143 = vpack.c.b16 %v663, %v659
  %v1144 = vpack.c.b16 %v664, %v660
  %v1145 = vpack.c.b16 %v665, %v661
  %v1146 = vpack.c.b16 %v666, %v662
  %v1147 = vpack.c.b16 %v671, %v667
  %v1148 = vpack.c.b16 %v672, %v668
  %v1149 = vpack.c.b16 %v673, %v669
  %v1150 = vpack.c.b16 %v674, %v670
  %v1151 = vpack.c.b16 %v679, %v675
  %v1152 = vpack.c.b16 %v680, %v676
  %v1153 = vpack.c.b16 %v681, %v677
  %v1154 = vpack.c.b16 %v682, %v678
  %v1155 = vpack.c.b16 %v687, %v683
  %v1156 = vpack.c.b16 %v688, %v684
  %v1157 = vpack.c.b16 %v689, %v685
  %v1158 = vpack.c.b16 %v690, %v686
  %v1159 = vpack.c.b16 %v695, %v691
  %v1160 = vpack.c.b16 %v696, %v692
  %v1161 = vpack.c.b16 %v697, %v693
  %v1162 = vpack.c.b16 %v698, %v694
  %v1163 = vpack.c.b16 %v703, %v699
  %v1164 = vpack.c.b16 %v704, %v700
  %v1165 = vpack.c.b16 %v705, %v701
  %v1166 = vpack.c.b16 %v706, %v702
  %v1167 = vpack.c.b16 %v711, %v707
  %v1168 = vpack.c.b16 %v712, %v708
  %v1169 = vpack.c.b16 %v713, %v709
  %v1170 = vpack.c.b16 %v714, %v710
  %v1171 = vpack.c.b16 %v719, %v715
  %v1172 = vpack.c.b16 %v720, %v716
  %v1173 = vpack.c.b16 %v721, %v717
  %v1174 = vpack.c.b16 %v722, %v718
  %v1175 = vpack.c.b16 %v727, %v723
  %v1176 = vpack.c.b16 %v728, %v724
  %v1177 = vpack.c.b16 %v729, %v725
  %v1178 = vpack.c.b16 %v730, %v726
  %v1179 = vpack.c.b16 %v735, %v731
  %v1180 = vpack.c.b16 %v736, %v732
  %v1181 = vpack.c.b16 %v737, %v733
  %v1182 = vpack.c.b16 %v738, %v734
  %v1183 = vpack.c.b16 %v743, %v739
  %v1184 = vpack.c.b16 %v744, %v740
  %v1185 = vpack.c.b16 %v745, %v741
  %v1186 = vpack.c.b16 %v746, %v742
  %v1187 = vpack.c.b16 %v751, %v747
  %v1188 = vpack.c.b16 %v752, %v748
  %v1189 = vpack.c.b16 %v753, %v749
  %v1190 = vpack.c.b16 %v754, %v750
  %v1191 = vpack.c.b16 %v759, %v755
  %v1192 = vpack.c.b16 %v760, %v756
  %v1193 = vpack.c.b16 %v761, %v757
  %v1194 = vpack.c.b16 %v762, %v758
  %v1195 = vpack.c.b16 %v767, %v763
  %v1196 = vpack.c.b16 %v768, %v764
  %v1197 = vpack.c.b16 %v769, %v765
  %v1198 = vpack.c.b16 %v770, %v766
  %v1199 = vpack.c.b16 %v775, %v771
  %v1200 = vpack.c.b16 %v776, %v772
  %v1201 = vpack.c.b16 %v777, %v773
  %v1202 = vpack.c.b16 %v778, %v774
  %v1203 = vpack.c.b16 %v783, %v779
  %v1204 = vpack.c.b16 %v784, %v780
  %v1205 = vpack.c.b16 %v785, %v781
  %v1206 = vpack.c.b16 %v786, %v782
  %v1207 = vpack.c.b16 %v791, %v787
  %v1208 = vpack.c.b16 %v792, %v788
  %v1209 = vpack.c.b16 %v793, %v789
  %v1210 = vpack.c.b16 %v794, %v790
  %v1211 = vpack.c.b16 %v799, %v795
  %v1212 = vpack.c.b16 %v800, %v796
  %v1213 = vpack.c.b16 %v801, %v797
  %v1214 = vpack.c.b16 %v802, %v798
  %v1215 = vpack.c.b16 %v807, %v803
  %v1216 = vpack.c.b16 %v808, %v804
  %v1217 = vpack.c.b16 %v809, %v805
  %v1218 = vpack.c.b16 %v810, %v806
  %v1219 = vpack.c.b16 %v815, %v811
  %v1220 = vpack.c.b16 %v816, %v812
  %v1221 = vpack.c.b16 %v817, %v813
  %v1222 = vpack.c.b16 %v818, %v814
  %v1223 = vpack.c.b16 %v823, %v819
  %v1224 = vpack.c.b16 %v824, %v820
  %v1225 = vpack.c.b16 %v825, %v821
  %v1226 = vpack.c.b16 %v826, %v822
  %v1227 = vpack.c.b16 %v831, %v827
  %v1228 = vpack.c.b16 %v832, %v828
  %v1229 = vpack.c.b16 %v833, %v829
  %v1230 = vpack.c.b16 %v834, %v830
  %v1231 = vpack.c.b16 %v839, %v835
  %v1232 = vpack.c.b16 %v840, %v836
  %v1233 = vpack.c.b16 %v841, %v837
  %v1234 = vpack.c.b16 %v842, %v838
  %v1235 = vpack.c.b16 %v847, %v843
  %v1236 = vpack.c.b16 %v848, %v844
  %v1237 = vpack.c.b16 %v849, %v845
  %v1238 = vpack.c.b16 %v850, %v846
  %v1239 = vpack.c.b16 %v855, %v851
  %v1240 = vpack.c.b16 %v856, %v852
  %v1241 = vpack.c.b16 %v857, %v853
  %v1242 = vpack.c.b16 %v858, %v854
  %v1243 = vpack.c.b16 %v863, %v859
  %v1244 = vpack.c.b16 %v864, %v860
  %v1245 = vpack.c.b16 %v865, %v861
  %v1246 = vpack.c.b16 %v866, %v862
  %v1247 = vpack.c.b16 %v871, %v867
  %v1248 = vpack.c.b16 %v872, %v868
  %v1249 = vpack.c.b16 %v873, %v869
  %v1250 = vpack.c.b16 %v874, %v870
  %v1251 = vpack.c.b16 %v879, %v875
  %v1252 = vpack.c.b16 %v880, %v876
  %v1253 = vpack.c.b16 %v881, %v877
  %v1254 = vpack.c.b16 %v882, %v878
  %v1255 = vpack.c.b16 %v887, %v883
  %v1256 = vpack.c.b16 %v888, %v884
  %v1257 = vpack.c.b16 %v889, %v885
  %v1258 = vpack.c.b16 %v890, %v886
  %v1259 = vpack.c.b16 %v895, %v891
  %v1260 = vpack.c.b16 %v896, %v892
  %v1261 = vpack.c.b16 %v897, %v893
  %v1262 = vpack.c.b16 %v898, %v894
  %v1263 = vpack.c.b16 %v903, %v899
  %v1264 = vpack.c.b16 %v904, %v900
  %v1265 = vpack.c.b16 %v905, %v901
  %v1266 = vpack.c.b16 %v906, %v902
  %v1267 = vpack.c.b16 %v911, %v907
  %v1268 = vpack.c.b16 %v912, %v908
  %v1269 = vpack.c.b16 %v913, %v909
  %v1270 = vpack.c.b16 %v914, %v910
  %v1271 = vpack.c.b16 %v919, %v915
  %v1272 = vpack.c.b16 %v920, %v916
  %v1273 = vpack.c.b16 %v921, %v917
  %v1274 = vpack.c.b16 %v922, %v918
  %v1275 = vpack.c.b16 %v927, %v923
  %v1276 = vpack.c.b16 %v928, %v924
  %v1277 = vpack.c.b16 %v929, %v925
  %v1278 = vpack.c.b16 %v930, %v926
  %v1279 = vpack.c.b16 %v935, %v931
  %v1280 = vpack.c.b16 %v936, %v932
  %v1281 = vpack.c.b16 %v937, %v933
  %v1282 = vpack.c.b16 %v938, %v934
  %v1283 = vpack.c.b16 %v943, %v939
  %v1284 = vpack.c.b16 %v944, %v940
  %v1285 = vpack.c.b16 %v945, %v941
  %v1286 = vpack.c.b16 %v946, %v942
  %v1287 = vpack.c.b16 %v951, %v947
  %v1288 = vpack.c.b16 %v952, %v948
  %v1289 = vpack.c.b16 %v953, %v949
  %v1290 = vpack.c.b16 %v954, %v950
  %v1291 = vpack.c.b16 %v959, %v955
  %v1292 = vpack.c.b16 %v960, %v956
  %v1293 = vpack.c.b16 %v961, %v957
  %v1294 = vpack.c.b16 %v962, %v958
  %v1295 = vpack.c.b16 %v967, %v963
  %v1296 = vpack.c.b16 %v968, %v964
  %v1297 = vpack.c.b16 %v969, %v965
  %v1298 = vpack.c.b16 %v970, %v966
  %v1299 = vpack.c.b16 %v975, %v971
  %v1300 = vpack.c.b16 %v976, %v972
  %v1301 = vpack.c.b16 %v977, %v973
  %v1302 = vpack.c.b16 %v978, %v974
  %v1303 = vpack.c.b16 %v983, %v979
  %v1304 = vpack.c.b16 %v984, %v980
  %v1305 = vpack.c.b16 %v985, %v981
  %v1306 = vpack.c.b16 %v986, %v982
  %v1307 = vpack.c.b16 %v991, %v987
  %v1308 = vpack.c.b16 %v992, %v988
  %v1309 = vpack.c.b16 %v993, %v989
  %v1310 = vpack.c.b16 %v994, %v990
  %v1311 = vpack.c.b16 %v999, %v995
  %v1312 = vpack.c.b16 %v1000, %v996
  %v1313 = vpack.c.b16 %v1001, %v997
  %v1314 = vpack.c.b16 %v1002, %v998
  %v1315 = vpack.c.b16 %v1007, %v1003
  %v1316 = vpack.c.b16 %v1008, %v1004
  %v1317 = vpack.c.b16 %v1009, %v1005
  %v1318 = vpack.c.b16 %v1010, %v1006
  %v1319 = vpack.c.b16 %v1015, %v1011
  %v1320 = vpack.c.b16 %v1016, %v1012
  %v1321 = vpack.c.b16 %v1017, %v1013
  %v1322 = vpack.c.b16 %v1018, %v1014
  %v1323 = vpack.c.b16 %v1023, %v1019
  %v1324 = vpack.c.b16 %v1024, %v1020
  %v1325 = vpack.c.b16 %v1025, %v1021
  %v1326 = vpack.c.b16 %v1026, %v1022
  %v1327 = vpack.c.b16 %v1031, %v1027
  %v1328 = vpack.c.b16 %v1032, %v1028
  %v1329 = vpack.c.b16 %v1033, %v1029
  %v1330 = vpack.c.b16 %v1034, %v1030
  %v1331 = vpack.c.b16 %v1039, %v1035
  %v1332 = vpack.c.b16 %v1040, %v1036
  %v1333 = vpack.c.b16 %v1041, %v1037
  %v1334 = vpack.c.b16 %v1042, %v1038
  %v1335 = vpack.c.b16 %v1047, %v1043
  %v1336 = vpack.c.b16 %v1048, %v1044
  %v1337 = vpack.c.b16 %v1049, %v1045
  %v1338 = vpack.c.b16 %v1050, %v1046
  %v1339 = vpack.c.b16 %v1055, %v1051
  %v1340 = vpack.c.b16 %v1056, %v1052
  %v1341 = vpack.c.b16 %v1057, %v1053
  %v1342 = vpack.c.b16 %v1058, %v1054
  %v1343 = vpack.c.b16 %v1063, %v1059
  %v1344 = vpack.c.b16 %v1064, %v1060
  %v1345 = vpack.c.b16 %v1065, %v1061
  %v1346 = vpack.c.b16 %v1066, %v1062
  %v1347 = vpack.c.b16 %v1071, %v1067
  %v1348 = vpack.c.b16 %v1072, %v1068
  %v1349 = vpack.c.b16 %v1073, %v1069
  %v1350 = vpack.c.b16 %v1074, %v1070
  %v1351 = vpack.c.b16 %v1079, %v1075
  %v1352 = vpack.c.b16 %v1080, %v1076
  %v1353 = vpack.c.b16 %v1081, %v1077
  %v1354 = vpack.c.b16 %v1082, %v1078
  %v1355 = vpack.c.b16 %v1087, %v1083
  %v1356 = vpack.c.b16 %v1088, %v1084
  %v1357 = vpack.c.b16 %v1089, %v1085
  %v1358 = vpack.c.b16 %v1090, %v1086
  %v1359 = vpack.c.b16 %v1095, %v1091
  %v1360 = vpack.c.b16 %v1096, %v1092
  %v1361 = vpack.c.b16 %v1097, %v1093
  %v1362 = vpack.c.b16 %v1098, %v1094
  %v1363 = vpack.c.b16 %v1103, %v1099
  %v1364 = vpack.c.b16 %v1104, %v1100
  %v1365 = vpack.c.b16 %v1105, %v1101
  %v1366 = vpack.c.b16 %v1106, %v1102
  %v1367 = vpack.c.b16 %v1111, %v1107
  %v1368 = vpack.c.b16 %v1112, %v1108
  %v1369 = vpack.c.b16 %v1113, %v1109
  %v1370 = vpack.c.b16 %v1114, %v1110
  %1627 = vmatprep.subr.bf16.mxu0 %v1144
  %1628 = vmatpush1.bf16.msra.mxu0 %v1143
  %1629 = vmatprep.subr.bf16.mxu0 %v1140
  %1630 = vmatpush1.bf16.msra.mxu0 %v1139
  %1631 = vmatprep.subr.bf16.mxu0 %v1136
  %1632 = vmatpush1.bf16.msra.mxu0 %v1135
  %1633 = vmatprep.subr.bf16.mxu0 %v1132
  %1634 = vmatpush1.bf16.msra.mxu0 %v1131
  %1635 = vmatprep.subr.bf16.mxu0 %v1128
  %1636 = vmatpush1.bf16.msra.mxu0 %v1127
  %1637 = vmatprep.subr.bf16.mxu0 %v1124
  %1638 = vmatpush1.bf16.msra.mxu0 %v1123
  %1639 = vmatprep.subr.bf16.mxu0 %v1120
  %1640 = vmatpush1.bf16.msra.mxu0 %v1119
  %1641 = vmatprep.subr.bf16.mxu0 %v1116
  %1642 = vmatpush1.bf16.msra.mxu0 %v1115
  %1643 = vmatprep.subr.bf16.mxu0 %v1176
  %1644 = vmatpush2.bf16.msra.mxu0 %v1175
  %1645 = vmatprep.subr.bf16.mxu0 %v1172
  %1646 = vmatpush2.bf16.msra.mxu0 %v1171
  %1647 = vmatprep.subr.bf16.mxu0 %v1168
  %1648 = vmatpush2.bf16.msra.mxu0 %v1167
  %1649 = vmatprep.subr.bf16.mxu0 %v1164
  %1650 = vmatpush2.bf16.msra.mxu0 %v1163
  %1651 = vmatprep.subr.bf16.mxu0 %v1160
  %1652 = vmatpush2.bf16.msra.mxu0 %v1159
  %1653 = vmatprep.subr.bf16.mxu0 %v1156
  %1654 = vmatpush2.bf16.msra.mxu0 %v1155
  %1655 = vmatprep.subr.bf16.mxu0 %v1152
  %1656 = vmatpush2.bf16.msra.mxu0 %v1151
  %1657 = vmatprep.subr.bf16.mxu0 %v1148
  %1658 = vmatpush2.bf16.msra.mxu0 %v1147
  %1659 = vmatprep.mubr.bf16.mxu0 %v332
  %1660 = vmatmul.mubr.bf16.gmra.mxu0 %v331
  %v1661 = vpop.f32.mrf.mxu0
  %v1662 = vadd.f32 %v290, %v1661
  %v1663 = vpop.f32.mrf.mxu0
  %v1664 = vadd.f32 %v294, %v1663
  %v1665 = vpop.f32.mrf.mxu0
  %v1666 = vadd.f32 %v290, %v1665
  %v1667 = vpop.f32.mrf.mxu0
  %v1668 = vadd.f32 %v294, %v1667
  %1669 = vdwg.mxu0
  %1670 = vmatprep.subr.bf16.mxu0 %v1208
  %1671 = vmatpush1.bf16.msra.mxu0 %v1207
  %1672 = vmatprep.subr.bf16.mxu0 %v1204
  %1673 = vmatpush1.bf16.msra.mxu0 %v1203
  %1674 = vmatprep.subr.bf16.mxu0 %v1200
  %1675 = vmatpush1.bf16.msra.mxu0 %v1199
  %1676 = vmatprep.subr.bf16.mxu0 %v1196
  %1677 = vmatpush1.bf16.msra.mxu0 %v1195
  %1678 = vmatprep.subr.bf16.mxu0 %v1192
  %1679 = vmatpush1.bf16.msra.mxu0 %v1191
  %1680 = vmatprep.subr.bf16.mxu0 %v1188
  %1681 = vmatpush1.bf16.msra.mxu0 %v1187
  %1682 = vmatprep.subr.bf16.mxu0 %v1184
  %1683 = vmatpush1.bf16.msra.mxu0 %v1183
  %1684 = vmatprep.subr.bf16.mxu0 %v1180
  %1685 = vmatpush1.bf16.msra.mxu0 %v1179
  %1686 = vmatprep.subr.bf16.mxu0 %v1240
  %1687 = vmatpush2.bf16.msra.mxu0 %v1239
  %1688 = vmatprep.subr.bf16.mxu0 %v1236
  %1689 = vmatpush2.bf16.msra.mxu0 %v1235
  %1690 = vmatprep.subr.bf16.mxu0 %v1232
  %1691 = vmatpush2.bf16.msra.mxu0 %v1231
  %1692 = vmatprep.subr.bf16.mxu0 %v1228
  %1693 = vmatpush2.bf16.msra.mxu0 %v1227
  %1694 = vmatprep.subr.bf16.mxu0 %v1224
  %1695 = vmatpush2.bf16.msra.mxu0 %v1223
  %1696 = vmatprep.subr.bf16.mxu0 %v1220
  %1697 = vmatpush2.bf16.msra.mxu0 %v1219
  %1698 = vmatprep.subr.bf16.mxu0 %v1216
  %1699 = vmatpush2.bf16.msra.mxu0 %v1215
  %1700 = vmatprep.subr.bf16.mxu0 %v1212
  %1701 = vmatpush2.bf16.msra.mxu0 %v1211
  %1702 = vmatprep.mubr.bf16.mxu0 %v334
  %1703 = vmatmul.mubr.bf16.gmra.mxu0 %v333
  %v1704 = vpop.f32.mrf.mxu0
  %v1705 = vadd.f32 %v1662, %v1704
  %v1706 = vpop.f32.mrf.mxu0
  %v1707 = vadd.f32 %v1664, %v1706
  %v1708 = vpop.f32.mrf.mxu0
  %v1709 = vadd.f32 %v1666, %v1708
  %v1710 = vpop.f32.mrf.mxu0
  %v1711 = vadd.f32 %v1668, %v1710
  %1712 = vdwg.mxu0
  %1713 = vmatprep.subr.bf16.mxu0 %v1272
  %1714 = vmatpush1.bf16.msra.mxu0 %v1271
  %1715 = vmatprep.subr.bf16.mxu0 %v1268
  %1716 = vmatpush1.bf16.msra.mxu0 %v1267
  %1717 = vmatprep.subr.bf16.mxu0 %v1264
  %1718 = vmatpush1.bf16.msra.mxu0 %v1263
  %1719 = vmatprep.subr.bf16.mxu0 %v1260
  %1720 = vmatpush1.bf16.msra.mxu0 %v1259
  %1721 = vmatprep.subr.bf16.mxu0 %v1256
  %1722 = vmatpush1.bf16.msra.mxu0 %v1255
  %1723 = vmatprep.subr.bf16.mxu0 %v1252
  %1724 = vmatpush1.bf16.msra.mxu0 %v1251
  %1725 = vmatprep.subr.bf16.mxu0 %v1248
  %1726 = vmatpush1.bf16.msra.mxu0 %v1247
  %1727 = vmatprep.subr.bf16.mxu0 %v1244
  %1728 = vmatpush1.bf16.msra.mxu0 %v1243
  %1729 = vmatprep.subr.bf16.mxu0 %v1304
  %1730 = vmatpush2.bf16.msra.mxu0 %v1303
  %1731 = vmatprep.subr.bf16.mxu0 %v1300
  %1732 = vmatpush2.bf16.msra.mxu0 %v1299
  %1733 = vmatprep.subr.bf16.mxu0 %v1296
  %1734 = vmatpush2.bf16.msra.mxu0 %v1295
  %1735 = vmatprep.subr.bf16.mxu0 %v1292
  %1736 = vmatpush2.bf16.msra.mxu0 %v1291
  %1737 = vmatprep.subr.bf16.mxu0 %v1288
  %1738 = vmatpush2.bf16.msra.mxu0 %v1287
  %1739 = vmatprep.subr.bf16.mxu0 %v1284
  %1740 = vmatpush2.bf16.msra.mxu0 %v1283
  %1741 = vmatprep.subr.bf16.mxu0 %v1280
  %1742 = vmatpush2.bf16.msra.mxu0 %v1279
  %1743 = vmatprep.subr.bf16.mxu0 %v1276
  %1744 = vmatpush2.bf16.msra.mxu0 %v1275
  %1745 = vmatprep.mubr.bf16.mxu0 %v336
  %1746 = vmatmul.mubr.bf16.gmra.mxu0 %v335
  %v1747 = vpop.f32.mrf.mxu0
  %v1748 = vadd.f32 %v1705, %v1747
  %v1749 = vpop.f32.mrf.mxu0
  %v1750 = vadd.f32 %v1707, %v1749
  %v1751 = vpop.f32.mrf.mxu0
  %v1752 = vadd.f32 %v1709, %v1751
  %v1753 = vpop.f32.mrf.mxu0
  %v1754 = vadd.f32 %v1711, %v1753
  %1755 = vdwg.mxu0
  %1756 = vmatprep.subr.bf16.mxu0 %v1336
  %1757 = vmatpush1.bf16.msra.mxu0 %v1335
  %1758 = vmatprep.subr.bf16.mxu0 %v1332
  %1759 = vmatpush1.bf16.msra.mxu0 %v1331
  %1760 = vmatprep.subr.bf16.mxu0 %v1328
  %1761 = vmatpush1.bf16.msra.mxu0 %v1327
  %1762 = vmatprep.subr.bf16.mxu0 %v1324
  %1763 = vmatpush1.bf16.msra.mxu0 %v1323
  %1764 = vmatprep.subr.bf16.mxu0 %v1320
  %1765 = vmatpush1.bf16.msra.mxu0 %v1319
  %1766 = vmatprep.subr.bf16.mxu0 %v1316
  %1767 = vmatpush1.bf16.msra.mxu0 %v1315
  %1768 = vmatprep.subr.bf16.mxu0 %v1312
  %1769 = vmatpush1.bf16.msra.mxu0 %v1311
  %1770 = vmatprep.subr.bf16.mxu0 %v1308
  %1771 = vmatpush1.bf16.msra.mxu0 %v1307
  %1772 = vmatprep.subr.bf16.mxu0 %v1368
  %1773 = vmatpush2.bf16.msra.mxu0 %v1367
  %1774 = vmatprep.subr.bf16.mxu0 %v1364
  %1775 = vmatpush2.bf16.msra.mxu0 %v1363
  %1776 = vmatprep.subr.bf16.mxu0 %v1360
  %1777 = vmatpush2.bf16.msra.mxu0 %v1359
  %1778 = vmatprep.subr.bf16.mxu0 %v1356
  %1779 = vmatpush2.bf16.msra.mxu0 %v1355
  %1780 = vmatprep.subr.bf16.mxu0 %v1352
  %1781 = vmatpush2.bf16.msra.mxu0 %v1351
  %1782 = vmatprep.subr.bf16.mxu0 %v1348
  %1783 = vmatpush2.bf16.msra.mxu0 %v1347
  %1784 = vmatprep.subr.bf16.mxu0 %v1344
  %1785 = vmatpush2.bf16.msra.mxu0 %v1343
  %1786 = vmatprep.subr.bf16.mxu0 %v1340
  %1787 = vmatpush2.bf16.msra.mxu0 %v1339
  %1788 = vmatprep.mubr.bf16.mxu0 %v338
  %1789 = vmatmul.mubr.bf16.gmra.mxu0 %v337
  %v1790 = vpop.f32.mrf.mxu0
  %v1791 = vadd.f32 %v1748, %v1790
  %v1792 = vpop.f32.mrf.mxu0
  %v1793 = vadd.f32 %v1750, %v1792
  %v1794 = vpop.f32.mrf.mxu0
  %v1795 = vadd.f32 %v1752, %v1794
  %v1796 = vpop.f32.mrf.mxu0
  %v1797 = vadd.f32 %v1754, %v1796
  %1798 = vdwg.mxu0
  %1799 = vmatprep.subr.bf16.mxu0 %v1146
  %1800 = vmatpush1.bf16.msra.mxu0 %v1145
  %1801 = vmatprep.subr.bf16.mxu0 %v1142
  %1802 = vmatpush1.bf16.msra.mxu0 %v1141
  %1803 = vmatprep.subr.bf16.mxu0 %v1138
  %1804 = vmatpush1.bf16.msra.mxu0 %v1137
  %1805 = vmatprep.subr.bf16.mxu0 %v1134
  %1806 = vmatpush1.bf16.msra.mxu0 %v1133
  %1807 = vmatprep.subr.bf16.mxu0 %v1130
  %1808 = vmatpush1.bf16.msra.mxu0 %v1129
  %1809 = vmatprep.subr.bf16.mxu0 %v1126
  %1810 = vmatpush1.bf16.msra.mxu0 %v1125
  %1811 = vmatprep.subr.bf16.mxu0 %v1122
  %1812 = vmatpush1.bf16.msra.mxu0 %v1121
  %1813 = vmatprep.subr.bf16.mxu0 %v1118
  %1814 = vmatpush1.bf16.msra.mxu0 %v1117
  %1815 = vmatprep.subr.bf16.mxu0 %v1178
  %1816 = vmatpush2.bf16.msra.mxu0 %v1177
  %1817 = vmatprep.subr.bf16.mxu0 %v1174
  %1818 = vmatpush2.bf16.msra.mxu0 %v1173
  %1819 = vmatprep.subr.bf16.mxu0 %v1170
  %1820 = vmatpush2.bf16.msra.mxu0 %v1169
  %1821 = vmatprep.subr.bf16.mxu0 %v1166
  %1822 = vmatpush2.bf16.msra.mxu0 %v1165
  %1823 = vmatprep.subr.bf16.mxu0 %v1162
  %1824 = vmatpush2.bf16.msra.mxu0 %v1161
  %1825 = vmatprep.subr.bf16.mxu0 %v1158
  %1826 = vmatpush2.bf16.msra.mxu0 %v1157
  %1827 = vmatprep.subr.bf16.mxu0 %v1154
  %1828 = vmatpush2.bf16.msra.mxu0 %v1153
  %1829 = vmatprep.subr.bf16.mxu0 %v1150
  %1830 = vmatpush2.bf16.msra.mxu0 %v1149
  %1831 = vmatprep.mubr.bf16.mxu0 %v332
  %1832 = vmatmul.mubr.bf16.gmra.mxu0 %v331
  %v1833 = vpop.f32.mrf.mxu0
  %v1834 = vadd.f32 %v298, %v1833
  %v1835 = vpop.f32.mrf.mxu0
  %v1836 = vadd.f32 %v302, %v1835
  %v1837 = vpop.f32.mrf.mxu0
  %v1838 = vadd.f32 %v298, %v1837
  %v1839 = vpop.f32.mrf.mxu0
  %v1840 = vadd.f32 %v302, %v1839
  %1841 = vdwg.mxu0
  %1842 = vmatprep.subr.bf16.mxu0 %v1210
  %1843 = vmatpush1.bf16.msra.mxu0 %v1209
  %1844 = vmatprep.subr.bf16.mxu0 %v1206
  %1845 = vmatpush1.bf16.msra.mxu0 %v1205
  %1846 = vmatprep.subr.bf16.mxu0 %v1202
  %1847 = vmatpush1.bf16.msra.mxu0 %v1201
  %1848 = vmatprep.subr.bf16.mxu0 %v1198
  %1849 = vmatpush1.bf16.msra.mxu0 %v1197
  %1850 = vmatprep.subr.bf16.mxu0 %v1194
  %1851 = vmatpush1.bf16.msra.mxu0 %v1193
  %1852 = vmatprep.subr.bf16.mxu0 %v1190
  %1853 = vmatpush1.bf16.msra.mxu0 %v1189
  %1854 = vmatprep.subr.bf16.mxu0 %v1186
  %1855 = vmatpush1.bf16.msra.mxu0 %v1185
  %1856 = vmatprep.subr.bf16.mxu0 %v1182
  %1857 = vmatpush1.bf16.msra.mxu0 %v1181
  %1858 = vmatprep.subr.bf16.mxu0 %v1242
  %1859 = vmatpush2.bf16.msra.mxu0 %v1241
  %1860 = vmatprep.subr.bf16.mxu0 %v1238
  %1861 = vmatpush2.bf16.msra.mxu0 %v1237
  %1862 = vmatprep.subr.bf16.mxu0 %v1234
  %1863 = vmatpush2.bf16.msra.mxu0 %v1233
  %1864 = vmatprep.subr.bf16.mxu0 %v1230
  %1865 = vmatpush2.bf16.msra.mxu0 %v1229
  %1866 = vmatprep.subr.bf16.mxu0 %v1226
  %1867 = vmatpush2.bf16.msra.mxu0 %v1225
  %1868 = vmatprep.subr.bf16.mxu0 %v1222
  %1869 = vmatpush2.bf16.msra.mxu0 %v1221
  %1870 = vmatprep.subr.bf16.mxu0 %v1218
  %1871 = vmatpush2.bf16.msra.mxu0 %v1217
  %1872 = vmatprep.subr.bf16.mxu0 %v1214
  %1873 = vmatpush2.bf16.msra.mxu0 %v1213
  %1874 = vmatprep.mubr.bf16.mxu0 %v334
  %1875 = vmatmul.mubr.bf16.gmra.mxu0 %v333
  %v1876 = vpop.f32.mrf.mxu0
  %v1877 = vadd.f32 %v1834, %v1876
  %v1878 = vpop.f32.mrf.mxu0
  %v1879 = vadd.f32 %v1836, %v1878
  %v1880 = vpop.f32.mrf.mxu0
  %v1881 = vadd.f32 %v1838, %v1880
  %v1882 = vpop.f32.mrf.mxu0
  %v1883 = vadd.f32 %v1840, %v1882
  %1884 = vdwg.mxu0
  %1885 = vmatprep.subr.bf16.mxu0 %v1274
  %1886 = vmatpush1.bf16.msra.mxu0 %v1273
  %1887 = vmatprep.subr.bf16.mxu0 %v1270
  %1888 = vmatpush1.bf16.msra.mxu0 %v1269
  %1889 = vmatprep.subr.bf16.mxu0 %v1266
  %1890 = vmatpush1.bf16.msra.mxu0 %v1265
  %1891 = vmatprep.subr.bf16.mxu0 %v1262
  %1892 = vmatpush1.bf16.msra.mxu0 %v1261
  %1893 = vmatprep.subr.bf16.mxu0 %v1258
  %1894 = vmatpush1.bf16.msra.mxu0 %v1257
  %1895 = vmatprep.subr.bf16.mxu0 %v1254
  %1896 = vmatpush1.bf16.msra.mxu0 %v1253
  %1897 = vmatprep.subr.bf16.mxu0 %v1250
  %1898 = vmatpush1.bf16.msra.mxu0 %v1249
  %1899 = vmatprep.subr.bf16.mxu0 %v1246
  %1900 = vmatpush1.bf16.msra.mxu0 %v1245
  %1901 = vmatprep.subr.bf16.mxu0 %v1306
  %1902 = vmatpush2.bf16.msra.mxu0 %v1305
  %1903 = vmatprep.subr.bf16.mxu0 %v1302
  %1904 = vmatpush2.bf16.msra.mxu0 %v1301
  %1905 = vmatprep.subr.bf16.mxu0 %v1298
  %1906 = vmatpush2.bf16.msra.mxu0 %v1297
  %1907 = vmatprep.subr.bf16.mxu0 %v1294
  %1908 = vmatpush2.bf16.msra.mxu0 %v1293
  %1909 = vmatprep.subr.bf16.mxu0 %v1290
  %1910 = vmatpush2.bf16.msra.mxu0 %v1289
  %1911 = vmatprep.subr.bf16.mxu0 %v1286
  %1912 = vmatpush2.bf16.msra.mxu0 %v1285
  %1913 = vmatprep.subr.bf16.mxu0 %v1282
  %1914 = vmatpush2.bf16.msra.mxu0 %v1281
  %1915 = vmatprep.subr.bf16.mxu0 %v1278
  %1916 = vmatpush2.bf16.msra.mxu0 %v1277
  %1917 = vmatprep.mubr.bf16.mxu0 %v336
  %1918 = vmatmul.mubr.bf16.gmra.mxu0 %v335
  %v1919 = vpop.f32.mrf.mxu0
  %v1920 = vadd.f32 %v1877, %v1919
  %v1921 = vpop.f32.mrf.mxu0
  %v1922 = vadd.f32 %v1879, %v1921
  %v1923 = vpop.f32.mrf.mxu0
  %v1924 = vadd.f32 %v1881, %v1923
  %v1925 = vpop.f32.mrf.mxu0
  %v1926 = vadd.f32 %v1883, %v1925
  %1927 = vdwg.mxu0
  %1928 = vmatprep.subr.bf16.mxu0 %v1338
  %1929 = vmatpush1.bf16.msra.mxu0 %v1337
  %1930 = vmatprep.subr.bf16.mxu0 %v1334
  %1931 = vmatpush1.bf16.msra.mxu0 %v1333
  %1932 = vmatprep.subr.bf16.mxu0 %v1330
  %1933 = vmatpush1.bf16.msra.mxu0 %v1329
  %1934 = vmatprep.subr.bf16.mxu0 %v1326
  %1935 = vmatpush1.bf16.msra.mxu0 %v1325
  %1936 = vmatprep.subr.bf16.mxu0 %v1322
  %1937 = vmatpush1.bf16.msra.mxu0 %v1321
  %1938 = vmatprep.subr.bf16.mxu0 %v1318
  %1939 = vmatpush1.bf16.msra.mxu0 %v1317
  %1940 = vmatprep.subr.bf16.mxu0 %v1314
  %1941 = vmatpush1.bf16.msra.mxu0 %v1313
  %1942 = vmatprep.subr.bf16.mxu0 %v1310
  %1943 = vmatpush1.bf16.msra.mxu0 %v1309
  %1944 = vmatprep.subr.bf16.mxu0 %v1370
  %1945 = vmatpush2.bf16.msra.mxu0 %v1369
  %1946 = vmatprep.subr.bf16.mxu0 %v1366
  %1947 = vmatpush2.bf16.msra.mxu0 %v1365
  %1948 = vmatprep.subr.bf16.mxu0 %v1362
  %1949 = vmatpush2.bf16.msra.mxu0 %v1361
  %1950 = vmatprep.subr.bf16.mxu0 %v1358
  %1951 = vmatpush2.bf16.msra.mxu0 %v1357
  %1952 = vmatprep.subr.bf16.mxu0 %v1354
  %1953 = vmatpush2.bf16.msra.mxu0 %v1353
  %1954 = vmatprep.subr.bf16.mxu0 %v1350
  %1955 = vmatpush2.bf16.msra.mxu0 %v1349
  %1956 = vmatprep.subr.bf16.mxu0 %v1346
  %1957 = vmatpush2.bf16.msra.mxu0 %v1345
  %1958 = vmatprep.subr.bf16.mxu0 %v1342
  %1959 = vmatpush2.bf16.msra.mxu0 %v1341
  %1960 = vmatprep.mubr.bf16.mxu0 %v338
  %1961 = vmatmul.mubr.bf16.gmra.mxu0 %v337
  %v1962 = vpop.f32.mrf.mxu0
  %v1963 = vadd.f32 %v1920, %v1962
  %v1964 = vpop.f32.mrf.mxu0
  %v1965 = vadd.f32 %v1922, %v1964
  %v1966 = vpop.f32.mrf.mxu0
  %v1967 = vadd.f32 %v1924, %v1966
  %v1968 = vpop.f32.mrf.mxu0
  %v1969 = vadd.f32 %v1926, %v1968
  %1970 = vdwg.mxu0
  %vm1971 = vcmp.ge.f32.partialorder %v1791, 0.0
  %vm1972 = vcmp.ge.f32.partialorder %v1793, 0.0
  %vm1973 = vcmp.ge.f32.partialorder %v1963, 0.0
  %vm1974 = vcmp.ge.f32.partialorder %v1965, 0.0
  %vm1975 = vcmp.ge.f32.partialorder %v1795, 0.0
  %vm1976 = vcmp.ge.f32.partialorder %v1797, 0.0
  %vm1977 = vcmp.ge.f32.partialorder %v1967, 0.0
  %vm1978 = vcmp.ge.f32.partialorder %v1969, 0.0
  %v1979 = vmul.f32 %v1791, 0.2
  %v1980 = vmul.f32 %v1793, 0.2
  %v1981 = vmul.f32 %v1963, 0.2
  %v1982 = vmul.f32 %v1965, 0.2
  %v1983 = vmul.f32 %v1795, 0.2
  %v1984 = vmul.f32 %v1797, 0.2
  %v1985 = vmul.f32 %v1967, 0.2
  %v1986 = vmul.f32 %v1969, 0.2
  %v1987 = vsel %vm1971, %v1791, %v1979
  %v1988 = vsel %vm1972, %v1793, %v1980
  %v1989 = vsel %vm1973, %v1963, %v1981
  %v1990 = vsel %vm1974, %v1965, %v1982
  %v1991 = vsel %vm1975, %v1795, %v1983
  %v1992 = vsel %vm1976, %v1797, %v1984
  %v1993 = vsel %vm1977, %v1967, %v1985
  %v1994 = vsel %vm1978, %v1969, %v1986
  %v1995 = vpack.c.bf16 %v1991, %v1987
  %v1996 = vpack.c.bf16 %v1992, %v1988
  %v1997 = vpack.c.bf16 %v1993, %v1989
  %v1998 = vpack.c.bf16 %v1994, %v1990
  %v1999 = vld [vmem:[%s3] sm:$0xf]
  %v2000 = vld [vmem:[%s3 + $0x4] sm:$0xf]
  %v2001 = vld [vmem:[%s3 + $0x8] sm:$0xf]
  %v2002 = vld [vmem:[%s3 + $0xc] sm:$0xf]
  %v2003 = vld [vmem:[%s3 + $0x10] sm:$0xf]
  %v2004 = vld [vmem:[%s3 + $0x14] sm:$0xf]
  %v2005 = vld [vmem:[%s3 + $0x18] sm:$0xf]
  %v2006 = vld [vmem:[%s3 + $0x1c] sm:$0xf]
  %v2007 = vld [vmem:[%s3 + $0x20] sm:$0xf]
  %v2008 = vld [vmem:[%s3 + $0x24] sm:$0xf]
  %v2009 = vld [vmem:[%s3 + $0x28] sm:$0xf]
  %v2010 = vld [vmem:[%s3 + $0x2c] sm:$0xf]
  %v2011 = vld [vmem:[%s3 + $0x30] sm:$0xf]
  %v2012 = vld [vmem:[%s3 + $0x34] sm:$0xf]
  %v2013 = vld [vmem:[%s3 + $0x38] sm:$0xf]
  %v2014 = vld [vmem:[%s3 + $0x3c] sm:$0xf]
  %v2015 = vld [vmem:[%s3 + $0x40] sm:$0xf]
  %v2016 = vld [vmem:[%s3 + $0x44] sm:$0xf]
  %v2017 = vld [vmem:[%s3 + $0x48] sm:$0xf]
  %v2018 = vld [vmem:[%s3 + $0x4c] sm:$0xf]
  %v2019 = vld [vmem:[%s3 + $0x50] sm:$0xf]
  %v2020 = vld [vmem:[%s3 + $0x54] sm:$0xf]
  %v2021 = vld [vmem:[%s3 + $0x58] sm:$0xf]
  %v2022 = vld [vmem:[%s3 + $0x5c] sm:$0xf]
  %v2023 = vld [vmem:[%s3 + $0x60] sm:$0xf]
  %v2024 = vld [vmem:[%s3 + $0x64] sm:$0xf]
  %v2025 = vld [vmem:[%s3 + $0x68] sm:$0xf]
  %v2026 = vld [vmem:[%s3 + $0x6c] sm:$0xf]
  %v2027 = vld [vmem:[%s3 + $0x70] sm:$0xf]
  %v2028 = vld [vmem:[%s3 + $0x74] sm:$0xf]
  %v2029 = vld [vmem:[%s3 + $0x78] sm:$0xf]
  %v2030 = vld [vmem:[%s3 + $0x7c] sm:$0xf]
  %v2031 = vld [vmem:[%s3 + $0x80] sm:$0xf]
  %v2032 = vld [vmem:[%s3 + $0x84] sm:$0xf]
  %v2033 = vld [vmem:[%s3 + $0x88] sm:$0xf]
  %v2034 = vld [vmem:[%s3 + $0x8c] sm:$0xf]
  %v2035 = vld [vmem:[%s3 + $0x90] sm:$0xf]
  %v2036 = vld [vmem:[%s3 + $0x94] sm:$0xf]
  %v2037 = vld [vmem:[%s3 + $0x98] sm:$0xf]
  %v2038 = vld [vmem:[%s3 + $0x9c] sm:$0xf]
  %v2039 = vld [vmem:[%s3 + $0xa0] sm:$0xf]
  %v2040 = vld [vmem:[%s3 + $0xa4] sm:$0xf]
  %v2041 = vld [vmem:[%s3 + $0xa8] sm:$0xf]
  %v2042 = vld [vmem:[%s3 + $0xac] sm:$0xf]
  %v2043 = vld [vmem:[%s3 + $0xb0] sm:$0xf]
  %v2044 = vld [vmem:[%s3 + $0xb4] sm:$0xf]
  %v2045 = vld [vmem:[%s3 + $0xb8] sm:$0xf]
  %v2046 = vld [vmem:[%s3 + $0xbc] sm:$0xf]
  %v2047 = vld [vmem:[%s3 + $0xc0] sm:$0xf]
  %v2048 = vld [vmem:[%s3 + $0xc4] sm:$0xf]
  %v2049 = vld [vmem:[%s3 + $0xc8] sm:$0xf]
  %v2050 = vld [vmem:[%s3 + $0xcc] sm:$0xf]
  %v2051 = vld [vmem:[%s3 + $0xd0] sm:$0xf]
  %v2052 = vld [vmem:[%s3 + $0xd4] sm:$0xf]
  %v2053 = vld [vmem:[%s3 + $0xd8] sm:$0xf]
  %v2054 = vld [vmem:[%s3 + $0xdc] sm:$0xf]
  %v2055 = vld [vmem:[%s3 + $0xe0] sm:$0xf]
  %v2056 = vld [vmem:[%s3 + $0xe4] sm:$0xf]
  %v2057 = vld [vmem:[%s3 + $0xe8] sm:$0xf]
  %v2058 = vld [vmem:[%s3 + $0xec] sm:$0xf]
  %v2059 = vld [vmem:[%s3 + $0xf0] sm:$0xf]
  %v2060 = vld [vmem:[%s3 + $0xf4] sm:$0xf]
  %v2061 = vld [vmem:[%s3 + $0xf8] sm:$0xf]
  %v2062 = vld [vmem:[%s3 + $0xfc] sm:$0xf]
  %v2063 = vld [vmem:[%s4] sm:$0x1]
  %v2065 = vlaneseq
  %v2066 = vshrl.u32 %v2065, 7
  %v2067 = vsub.s32 0, %v2066
  %v2068 = vrot.slane %v2063, %v2067
  %v2134 = vunpack.c.l.b16 %v1999
  %v2135 = vunpack.c.l.b16 %v2000
  %v2136 = vunpack.c.l.b16 %v2001
  %v2137 = vunpack.c.l.b16 %v2002
  %v2138 = vunpack.c.l.b16 %v2003
  %v2139 = vunpack.c.l.b16 %v2004
  %v2140 = vunpack.c.l.b16 %v2005
  %v2141 = vunpack.c.l.b16 %v2006
  %v2142 = vunpack.c.l.b16 %v2007
  %v2143 = vunpack.c.l.b16 %v2008
  %v2144 = vunpack.c.l.b16 %v2009
  %v2145 = vunpack.c.l.b16 %v2010
  %v2146 = vunpack.c.l.b16 %v2011
  %v2147 = vunpack.c.l.b16 %v2012
  %v2148 = vunpack.c.l.b16 %v2013
  %v2149 = vunpack.c.l.b16 %v2014
  %v2150 = vunpack.c.l.b16 %v2015
  %v2151 = vunpack.c.l.b16 %v2016
  %v2152 = vunpack.c.l.b16 %v2017
  %v2153 = vunpack.c.l.b16 %v2018
  %v2154 = vunpack.c.l.b16 %v2019
  %v2155 = vunpack.c.l.b16 %v2020
  %v2156 = vunpack.c.l.b16 %v2021
  %v2157 = vunpack.c.l.b16 %v2022
  %v2158 = vunpack.c.l.b16 %v2023
  %v2159 = vunpack.c.l.b16 %v2024
  %v2160 = vunpack.c.l.b16 %v2025
  %v2161 = vunpack.c.l.b16 %v2026
  %v2162 = vunpack.c.l.b16 %v2027
  %v2163 = vunpack.c.l.b16 %v2028
  %v2164 = vunpack.c.l.b16 %v2029
  %v2165 = vunpack.c.l.b16 %v2030
  %v2166 = vunpack.c.l.b16 %v2031
  %v2167 = vunpack.c.l.b16 %v2032
  %v2168 = vunpack.c.l.b16 %v2033
  %v2169 = vunpack.c.l.b16 %v2034
  %v2170 = vunpack.c.l.b16 %v2035
  %v2171 = vunpack.c.l.b16 %v2036
  %v2172 = vunpack.c.l.b16 %v2037
  %v2173 = vunpack.c.l.b16 %v2038
  %v2174 = vunpack.c.l.b16 %v2039
  %v2175 = vunpack.c.l.b16 %v2040
  %v2176 = vunpack.c.l.b16 %v2041
  %v2177 = vunpack.c.l.b16 %v2042
  %v2178 = vunpack.c.l.b16 %v2043
  %v2179 = vunpack.c.l.b16 %v2044
  %v2180 = vunpack.c.l.b16 %v2045
  %v2181 = vunpack.c.l.b16 %v2046
  %v2182 = vunpack.c.l.b16 %v2047
  %v2183 = vunpack.c.l.b16 %v2048
  %v2184 = vunpack.c.l.b16 %v2049
  %v2185 = vunpack.c.l.b16 %v2050
  %v2186 = vunpack.c.l.b16 %v2051
  %v2187 = vunpack.c.l.b16 %v2052
  %v2188 = vunpack.c.l.b16 %v2053
  %v2189 = vunpack.c.l.b16 %v2054
  %v2190 = vunpack.c.l.b16 %v2055
  %v2191 = vunpack.c.l.b16 %v2056
  %v2192 = vunpack.c.l.b16 %v2057
  %v2193 = vunpack.c.l.b16 %v2058
  %v2194 = vunpack.c.l.b16 %v2059
  %v2195 = vunpack.c.l.b16 %v2060
  %v2196 = vunpack.c.l.b16 %v2061
  %v2197 = vunpack.c.l.b16 %v2062
  %v2198 = vpack.c.b16 %v2135, %v2134
  %v2199 = vpack.c.b16 %v2137, %v2136
  %v2200 = vpack.c.b16 %v2139, %v2138
  %v2201 = vpack.c.b16 %v2141, %v2140
  %v2202 = vpack.c.b16 %v2143, %v2142
  %v2203 = vpack.c.b16 %v2145, %v2144
  %v2204 = vpack.c.b16 %v2147, %v2146
  %v2205 = vpack.c.b16 %v2149, %v2148
  %v2206 = vpack.c.b16 %v2151, %v2150
  %v2207 = vpack.c.b16 %v2153, %v2152
  %v2208 = vpack.c.b16 %v2155, %v2154
  %v2209 = vpack.c.b16 %v2157, %v2156
  %v2210 = vpack.c.b16 %v2159, %v2158
  %v2211 = vpack.c.b16 %v2161, %v2160
  %v2212 = vpack.c.b16 %v2163, %v2162
  %v2213 = vpack.c.b16 %v2165, %v2164
  %v2214 = vpack.c.b16 %v2167, %v2166
  %v2215 = vpack.c.b16 %v2169, %v2168
  %v2216 = vpack.c.b16 %v2171, %v2170
  %v2217 = vpack.c.b16 %v2173, %v2172
  %v2218 = vpack.c.b16 %v2175, %v2174
  %v2219 = vpack.c.b16 %v2177, %v2176
  %v2220 = vpack.c.b16 %v2179, %v2178
  %v2221 = vpack.c.b16 %v2181, %v2180
  %v2222 = vpack.c.b16 %v2183, %v2182
  %v2223 = vpack.c.b16 %v2185, %v2184
  %v2224 = vpack.c.b16 %v2187, %v2186
  %v2225 = vpack.c.b16 %v2189, %v2188
  %v2226 = vpack.c.b16 %v2191, %v2190
  %v2227 = vpack.c.b16 %v2193, %v2192
  %v2228 = vpack.c.b16 %v2195, %v2194
  %v2229 = vpack.c.b16 %v2197, %v2196
  %2262 = vmatprep.subr.bf16.mxu0 0
  %2263 = vmatpush1.bf16.msra.mxu0 %v2205
  %2264 = vmatprep.subr.bf16.mxu0 0
  %2265 = vmatpush1.bf16.msra.mxu0 %v2204
  %2266 = vmatprep.subr.bf16.mxu0 0
  %2267 = vmatpush1.bf16.msra.mxu0 %v2203
  %2268 = vmatprep.subr.bf16.mxu0 0
  %2269 = vmatpush1.bf16.msra.mxu0 %v2202
  %2270 = vmatprep.subr.bf16.mxu0 0
  %2271 = vmatpush1.bf16.msra.mxu0 %v2201
  %2272 = vmatprep.subr.bf16.mxu0 0
  %2273 = vmatpush1.bf16.msra.mxu0 %v2200
  %2274 = vmatprep.subr.bf16.mxu0 0
  %2275 = vmatpush1.bf16.msra.mxu0 %v2199
  %2276 = vmatprep.subr.bf16.mxu0 0
  %2277 = vmatpush1.bf16.msra.mxu0 %v2198
  %2278 = vmatprep.subr.bf16.mxu0 0
  %2279 = vmatpush2.bf16.msra.mxu0 %v2213
  %2280 = vmatprep.subr.bf16.mxu0 0
  %2281 = vmatpush2.bf16.msra.mxu0 %v2212
  %2282 = vmatprep.subr.bf16.mxu0 0
  %2283 = vmatpush2.bf16.msra.mxu0 %v2211
  %2284 = vmatprep.subr.bf16.mxu0 0
  %2285 = vmatpush2.bf16.msra.mxu0 %v2210
  %2286 = vmatprep.subr.bf16.mxu0 0
  %2287 = vmatpush2.bf16.msra.mxu0 %v2209
  %2288 = vmatprep.subr.bf16.mxu0 0
  %2289 = vmatpush2.bf16.msra.mxu0 %v2208
  %2290 = vmatprep.subr.bf16.mxu0 0
  %2291 = vmatpush2.bf16.msra.mxu0 %v2207
  %2292 = vmatprep.subr.bf16.mxu0 0
  %2293 = vmatpush2.bf16.msra.mxu0 %v2206
  %2294 = vmatprep.mubr.bf16.mxu0 %v1996
  %2295 = vmatmul.mubr.bf16.gmra.mxu0 %v1995
  %v2296 = vpop.f32.mrf.mxu0
  %v2297 = vadd.f32 %v2068, %v2296
  %v2298 = vpop.f32.mrf.mxu0
  %v2299 = vpop.f32.mrf.mxu0
  %v2300 = vadd.f32 %v2068, %v2299
  %v2301 = vpop.f32.mrf.mxu0
  %2302 = vdwg.mxu0
  %2303 = vmatprep.subr.bf16.mxu0 0
  %2304 = vmatpush1.bf16.msra.mxu0 %v2221
  %2305 = vmatprep.subr.bf16.mxu0 0
  %2306 = vmatpush1.bf16.msra.mxu0 %v2220
  %2307 = vmatprep.subr.bf16.mxu0 0
  %2308 = vmatpush1.bf16.msra.mxu0 %v2219
  %2309 = vmatprep.subr.bf16.mxu0 0
  %2310 = vmatpush1.bf16.msra.mxu0 %v2218
  %2311 = vmatprep.subr.bf16.mxu0 0
  %2312 = vmatpush1.bf16.msra.mxu0 %v2217
  %2313 = vmatprep.subr.bf16.mxu0 0
  %2314 = vmatpush1.bf16.msra.mxu0 %v2216
  %2315 = vmatprep.subr.bf16.mxu0 0
  %2316 = vmatpush1.bf16.msra.mxu0 %v2215
  %2317 = vmatprep.subr.bf16.mxu0 0
  %2318 = vmatpush1.bf16.msra.mxu0 %v2214
  %2319 = vmatprep.subr.bf16.mxu0 0
  %2320 = vmatpush2.bf16.msra.mxu0 %v2229
  %2321 = vmatprep.subr.bf16.mxu0 0
  %2322 = vmatpush2.bf16.msra.mxu0 %v2228
  %2323 = vmatprep.subr.bf16.mxu0 0
  %2324 = vmatpush2.bf16.msra.mxu0 %v2227
  %2325 = vmatprep.subr.bf16.mxu0 0
  %2326 = vmatpush2.bf16.msra.mxu0 %v2226
  %2327 = vmatprep.subr.bf16.mxu0 0
  %2328 = vmatpush2.bf16.msra.mxu0 %v2225
  %2329 = vmatprep.subr.bf16.mxu0 0
  %2330 = vmatpush2.bf16.msra.mxu0 %v2224
  %2331 = vmatprep.subr.bf16.mxu0 0
  %2332 = vmatpush2.bf16.msra.mxu0 %v2223
  %2333 = vmatprep.subr.bf16.mxu0 0
  %2334 = vmatpush2.bf16.msra.mxu0 %v2222
  %2335 = vmatprep.mubr.bf16.mxu0 %v1998
  %2336 = vmatmul.mubr.bf16.gmra.mxu0 %v1997
  %v2337 = vpop.f32.mrf.mxu0
  %v2338 = vadd.f32 %v2297, %v2337
  %v2339 = vpop.f32.mrf.mxu0
  %v2340 = vpop.f32.mrf.mxu0
  %v2341 = vadd.f32 %v2300, %v2340
  %v2342 = vpop.f32.mrf.mxu0
  %2343 = vdwg.mxu0
  %2344 = vst [vmem:[%s5] sm:$0xff] %v2338
  %2345 = vst [vmem:[%s5 + $0x8] sm:$0xff] %v2341
  // Predicated region
  $region22: #{encoder_conv_forward.5} parent=0 // pred_check
    _
  $region23: #{encoder_conv_forward.5} parent=0 // pred_check_branch
    %2347 = sbr.rel (0) target = $region25
  $region24: #{encoder_conv_forward.5} parent=0 // pred_region
    _
  $region25: #{encoder_conv_forward.5} parent=0 // pred_fallthru
    _
  // Predicated region
  $region26: #{encoder_conv_forward.5} parent=0 // pred_check
    _
  $region27: #{encoder_conv_forward.5} parent=0 // pred_check_branch
    %2349 = sbr.rel (0) target = $region29
  $region28: #{encoder_conv_forward.5} parent=0 // pred_region
    _
  $region29: #{encoder_conv_forward.5} parent=0 // pred_fallthru
    _

</llo_original>
